<compile_context>
chip_gen: v6e
topology: v6e:2x2x1
jax: 0.10.0
libtpu: 0.0.40
codegen_flags: <defaults>
</compile_context>

<pallas_src>
import jax
import jax.numpy as jnp
from jax.experimental import pallas as pl
from jax.experimental.pallas import tpu as pltpu

LANE = 128           # TPU lane width: pad the action dim to this for dense stores
NEG_LARGE = -1e30    # effectively -inf for padded logit columns (finite, f32 only)


def _round_up(n, m):
    return ((n + m - 1) // m) * m


def actor_kernel(x_ref, w1_ref, b1_ref, w2_ref, b2_ref, out_ref):
    # x : [TB, S]  f32      w1: [S, H]     f32      b1: [1, H]     f32
    # w2: [H, A_pad] bf16   b2: [1, A_pad] f32 (padded cols = NEG_LARGE)
    x = x_ref[...]
    w1 = w1_ref[...]
    S = x.shape[1]

    # Linear-1 on the VPU: K = S = 4 is far below the MXU contraction depth,
    # so S broadcast multiply-adds in f32 are cheaper than an MXU push/drain
    # and keep the inputs at full precision (no bf16 cast of x / W1).
    acc = x[:, 0:1] * w1[0:1, :]
    for k in range(1, S):
        acc = acc + x[:, k:k + 1] * w1[k:k + 1, :]
    h = jnp.maximum(acc + b1_ref[...], 0.0)                         # [TB, H] f32

    # Linear-2 on the MXU (H = 128 contraction): bf16 operands, f32 accumulation.
    logits = jnp.dot(h.astype(jnp.bfloat16), w2_ref[...],
                     preferred_element_type=jnp.float32)
    logits = logits + b2_ref[...]                                   # [TB, A_pad] f32

    # Numerically-stable softmax; padded columns sit at ~-1e30 so their exp
    # underflows to exactly 0 and they never affect max or denominator.
    m = jnp.max(logits, axis=-1, keepdims=True)
    e = jnp.exp(logits - m)
    denom = jnp.sum(e, axis=-1, keepdims=True)
    probs = e / denom           # exact divide: keeps rows summing to 1 tightly
    out_ref[...] = probs.astype(out_ref.dtype)


def prepare_actor_params(w1, b1, w2, b2):
    """One-time preprocessing: pad action dim to the lane width, cast W2 to bf16.

    Done once at init so the per-step forward pays no pad/cast XLA ops.
    """
    A = w2.shape[1]
    a_pad = _round_up(A, LANE)
    # Zero weight columns + huge negative bias so padded logits never win the
    # max nor contribute to the softmax denominator. b2 MUST stay f32.
    w2_p = jnp.pad(w2, ((0, 0), (0, a_pad - A))).astype(jnp.bfloat16)
    b2_p = jnp.pad(b2.astype(jnp.float32), ((0, 0), (0, a_pad - A)),
                   constant_values=NEG_LARGE)
    return (w1.astype(jnp.float32), b1.astype(jnp.float32), w2_p, b2_p, A)


def _default_block_b(batch):
    # Small batches: a single grid step covering everything (no pad, one step
    # overhead). Larger batches: an even number of 256-row steps, so v7x's two
    # TensorCores both get work and v6e/v7x MXU tiles are full height; capped
    # at 1024 rows (VMEM is never a constraint at these sizes).
    if batch <= 256:
        return _round_up(max(batch, 8), 8)
    return min(1024, _round_up(-(-batch // 2), 256))


def actor_forward(x, params, *, block_b=None):
    """probs = softmax(relu(x @ w1 + b1) @ w2 + b2, -1), fused in one Pallas kernel."""
    w1, b1, w2_p, b2_p, n_actions = params
    B, S = x.shape
    H = w1.shape[1]
    a_pad = w2_p.shape[1]

    if block_b is None:
        block_b = _default_block_b(B)
    b_pad = _round_up(B, block_b)
    # Cold path only: with the default block_b choice a nicely-shaped batch
    # (<=256, or a multiple of 256/512) needs no padding copy.
    x_p = x if b_pad == B else jnp.pad(x, ((0, b_pad - B), (0, 0)))

    cost = pl.CostEstimate(
        flops=2 * b_pad * (S * H + H * a_pad),
        transcendentals=b_pad * a_pad,                     # the exp in softmax
        bytes_accessed=(x_p.size * 4 + w1.size * 4 + b1.size * 4
                        + w2_p.size * 2 + b2_p.size * 4 + b_pad * a_pad * 2),
    )

    out = pl.pallas_call(
        actor_kernel,
        out_shape=jax.ShapeDtypeStruct((b_pad, a_pad), jnp.bfloat16),
        grid=(b_pad // block_b,),
        in_specs=[
            pl.BlockSpec((block_b, S), lambda i: (i, 0)),   # x: tiled over batch
            pl.BlockSpec((S, H), lambda i: (0, 0)),         # weights stay VMEM-resident
            pl.BlockSpec((1, H), lambda i: (0, 0)),
            pl.BlockSpec((H, a_pad), lambda i: (0, 0)),
            pl.BlockSpec((1, a_pad), lambda i: (0, 0)),
        ],
        out_specs=pl.BlockSpec((block_b, a_pad), lambda i: (i, 0)),
        compiler_params=pltpu.CompilerParams(
            dimension_semantics=("parallel",)),             # v7x: 2 TCs split the batch
        cost_estimate=cost,
    )(x_p, w1, b1, w2_p, b2_p)

    return out[:B, :n_actions].astype(jnp.float32)


def init_actor_params(key, state_space, hidden, action_space):
    # Deterministic PyTorch-style init: U(-1/sqrt(fan_in), 1/sqrt(fan_in))
    k1, k2, k3, k4 = jax.random.split(key, 4)
    lim1 = 1.0 / jnp.sqrt(state_space)
    lim2 = 1.0 / jnp.sqrt(hidden)
    w1 = jax.random.uniform(k1, (state_space, hidden), jnp.float32, -lim1, lim1)
    b1 = jax.random.uniform(k2, (1, hidden), jnp.float32, -lim1, lim1)
    w2 = jax.random.uniform(k3, (hidden, action_space), jnp.float32, -lim2, lim2)
    b2 = jax.random.uniform(k4, (1, action_space), jnp.float32, -lim2, lim2)
    return w1, b1, w2, b2


if __name__ == "__main__":
    # CartPole-v0: state_space = 4, action_space = 2; hidden = 128 (from the module).
    STATE, HIDDEN, ACTIONS = 4, 128, 2
    BATCH = 512   # -> block_b = 256, grid = (2,): two full-height tiles / both v7x TCs

    key = jax.random.PRNGKey(0)
    kx, kp = jax.random.split(key)
    x = jax.random.normal(kx, (BATCH, STATE), dtype=jnp.float32)
    w1, b1, w2, b2 = init_actor_params(kp, STATE, HIDDEN, ACTIONS)

    # One-time parameter preprocessing (hoisted out of the hot path).
    params = prepare_actor_params(w1, b1, w2, b2)

    probs = actor_forward(x, params)
    probs = jax.block_until_ready(probs)
    assert probs.shape == (BATCH, ACTIONS)

    # Reference: the original full-f32 module forward. Tolerances cover the
    # bf16 second-matmul operands and the bf16 output slab.
    ref_f32 = jax.nn.softmax(jnp.maximum(x @ w1 + b1, 0.0) @ w2 + b2, axis=-1)
    assert jnp.allclose(probs, ref_f32, atol=5e-2, rtol=5e-2)

    # Rows sum to 1 (exact divide in-kernel; slack only for the bf16 output cast).
    assert jnp.allclose(jnp.sum(probs, axis=-1), 1.0, atol=1e-2)
    assert bool(jnp.all(probs >= 0.0))

    print("KERNEL_OK")
</pallas_src>

<mosaic_0001>
module attributes {stable_mosaic.version = 11 : i64} {
  func.func @actor_kernel(%arg0: i32, %arg1: memref<256x4xf32, #tpu.memory_space<vmem>>, %arg2: memref<4x128xf32, #tpu.memory_space<vmem>>, %arg3: memref<1x128xf32, #tpu.memory_space<vmem>>, %arg4: memref<128x128xbf16, #tpu.memory_space<vmem>>, %arg5: memref<1x128xf32, #tpu.memory_space<vmem>>, %arg6: memref<256x128xbf16, #tpu.memory_space<vmem>>) attributes {dimension_semantics = [#tpu.dimension_semantics<parallel>], iteration_bounds = array<i64: 2>, scalar_prefetch = 0 : i64, scratch_operands = 0 : i64, tpu.core_type = #tpu.core_type<tc>, window_params = [{transform_indices = @transform_0, window_bounds = array<i64: 256, 4>}, {pipeline_mode = #tpu.pipeline_mode<synchronous>, transform_indices = @transform_1, window_bounds = array<i64: 4, 128>}, {pipeline_mode = #tpu.pipeline_mode<synchronous>, transform_indices = @transform_2, window_bounds = array<i64: 1, 128>}, {pipeline_mode = #tpu.pipeline_mode<synchronous>, transform_indices = @transform_3, window_bounds = array<i64: 128, 128>}, {pipeline_mode = #tpu.pipeline_mode<synchronous>, transform_indices = @transform_4, window_bounds = array<i64: 1, 128>}, {transform_indices = @transform_5, window_bounds = array<i64: 256, 128>}]} {
    %c0 = arith.constant 0 : index
    %c0_0 = arith.constant 0 : index
    %0 = vector.load %arg1[%c0, %c0_0] : memref<256x4xf32, #tpu.memory_space<vmem>>, vector<256x4xf32>
    %c0_1 = arith.constant 0 : index
    %c0_2 = arith.constant 0 : index
    %1 = vector.load %arg2[%c0_1, %c0_2] : memref<4x128xf32, #tpu.memory_space<vmem>>, vector<4x128xf32>
    %2 = vector.extract_strided_slice %0 {offsets = [0, 0], sizes = [256, 1], strides = [1, 1]} : vector<256x4xf32> to vector<256x1xf32>
    %3 = vector.extract_strided_slice %1 {offsets = [0, 0], sizes = [1, 128], strides = [1, 1]} : vector<4x128xf32> to vector<1x128xf32>
    %4 = vector.broadcast %2 : vector<256x1xf32> to vector<256x128xf32>
    %5 = vector.broadcast %3 : vector<1x128xf32> to vector<256x128xf32>
    %6 = arith.mulf %4, %5 : vector<256x128xf32>
    %7 = vector.extract_strided_slice %0 {offsets = [0, 1], sizes = [256, 1], strides = [1, 1]} : vector<256x4xf32> to vector<256x1xf32>
    %8 = vector.extract_strided_slice %1 {offsets = [1, 0], sizes = [1, 128], strides = [1, 1]} : vector<4x128xf32> to vector<1x128xf32>
    %9 = vector.broadcast %7 : vector<256x1xf32> to vector<256x128xf32>
    %10 = vector.broadcast %8 : vector<1x128xf32> to vector<256x128xf32>
    %11 = arith.mulf %9, %10 : vector<256x128xf32>
    %12 = arith.addf %6, %11 : vector<256x128xf32>
    %13 = vector.extract_strided_slice %0 {offsets = [0, 2], sizes = [256, 1], strides = [1, 1]} : vector<256x4xf32> to vector<256x1xf32>
    %14 = vector.extract_strided_slice %1 {offsets = [2, 0], sizes = [1, 128], strides = [1, 1]} : vector<4x128xf32> to vector<1x128xf32>
    %15 = vector.broadcast %13 : vector<256x1xf32> to vector<256x128xf32>
    %16 = vector.broadcast %14 : vector<1x128xf32> to vector<256x128xf32>
    %17 = arith.mulf %15, %16 : vector<256x128xf32>
    %18 = arith.addf %12, %17 : vector<256x128xf32>
    %19 = vector.extract_strided_slice %0 {offsets = [0, 3], sizes = [256, 1], strides = [1, 1]} : vector<256x4xf32> to vector<256x1xf32>
    %20 = vector.extract_strided_slice %1 {offsets = [3, 0], sizes = [1, 128], strides = [1, 1]} : vector<4x128xf32> to vector<1x128xf32>
    %21 = vector.broadcast %19 : vector<256x1xf32> to vector<256x128xf32>
    %22 = vector.broadcast %20 : vector<1x128xf32> to vector<256x128xf32>
    %23 = arith.mulf %21, %22 : vector<256x128xf32>
    %24 = arith.addf %18, %23 : vector<256x128xf32>
    %c0_3 = arith.constant 0 : index
    %c0_4 = arith.constant 0 : index
    %25 = vector.load %arg3[%c0_3, %c0_4] : memref<1x128xf32, #tpu.memory_space<vmem>>, vector<1x128xf32>
    %26 = vector.broadcast %25 : vector<1x128xf32> to vector<256x128xf32>
    %27 = arith.addf %24, %26 : vector<256x128xf32>
    %cst = arith.constant 0.000000e+00 : f32
    %28 = vector.broadcast %cst : f32 to vector<256x128xf32>
    %29 = arith.maximumf %27, %28 : vector<256x128xf32>
    %30 = arith.truncf %29 : vector<256x128xf32> to vector<256x128xbf16>
    %c0_5 = arith.constant 0 : index
    %c0_6 = arith.constant 0 : index
    %31 = vector.load %arg4[%c0_5, %c0_6] : memref<128x128xbf16, #tpu.memory_space<vmem>>, vector<128x128xbf16>
    %cst_7 = arith.constant dense<0.000000e+00> : vector<256x128xf32>
    %32 = tpu.matmul %30, %31, %cst_7 {dimension_numbers = #tpu.dot_dimension_numbers<[1], [0], [0], [1], [0, 0, 1, 1], [], []>} : vector<256x128xbf16>, vector<128x128xbf16>, vector<256x128xf32> -> vector<256x128xf32>
    %c0_8 = arith.constant 0 : index
    %c0_9 = arith.constant 0 : index
    %33 = vector.load %arg5[%c0_8, %c0_9] : memref<1x128xf32, #tpu.memory_space<vmem>>, vector<1x128xf32>
    %34 = vector.broadcast %33 : vector<1x128xf32> to vector<256x128xf32>
    %35 = arith.addf %32, %34 : vector<256x128xf32>
    %cst_10 = arith.constant dense<0xFF800000> : vector<256xf32>
    %36 = vector.multi_reduction <maximumf>, %35, %cst_10 [1] : vector<256x128xf32> to vector<256xf32>
    %37 = vector.shape_cast %36 : vector<256xf32> to vector<256x1xf32>
    %38 = vector.broadcast %37 : vector<256x1xf32> to vector<256x128xf32>
    %39 = arith.subf %35, %38 : vector<256x128xf32>
    %40 = math.exp %39 : vector<256x128xf32>
    %cst_11 = arith.constant dense<0.000000e+00> : vector<256xf32>
    %41 = vector.multi_reduction <add>, %40, %cst_11 [1] : vector<256x128xf32> to vector<256xf32>
    %42 = vector.shape_cast %41 : vector<256xf32> to vector<256x1xf32>
    %43 = vector.broadcast %42 : vector<256x1xf32> to vector<256x128xf32>
    %44 = arith.divf %40, %43 : vector<256x128xf32>
    %45 = arith.truncf %44 : vector<256x128xf32> to vector<256x128xbf16>
    %c0_12 = arith.constant 0 : index
    %c0_13 = arith.constant 0 : index
    %46 = vector.load %arg6[%c0_12, %c0_13] : memref<256x128xbf16, #tpu.memory_space<vmem>>, vector<256x128xbf16>
    tpu.vector_store %arg6[%c0_12, %c0_13], %45 {strides = array<i32>} : memref<256x128xbf16, #tpu.memory_space<vmem>>, vector<256x128xbf16>,
    return
  }
  func.func @transform_0(%arg0: i32) -> (i32, i32) {
    %c0_i32 = arith.constant 0 : i32
    %c0_i32_0 = arith.constant 0 : i32
    return %arg0, %c0_i32 : i32, i32
  }
  func.func @transform_1(%arg0: i32) -> (i32, i32) {
    %c0_i32 = arith.constant 0 : i32
    %c0_i32_0 = arith.constant 0 : i32
    %c0_i32_1 = arith.constant 0 : i32
    return %c0_i32, %c0_i32_0 : i32, i32
  }
  func.func @transform_2(%arg0: i32) -> (i32, i32) {
    %c0_i32 = arith.constant 0 : i32
    %c0_i32_0 = arith.constant 0 : i32
    %c0_i32_1 = arith.constant 0 : i32
    return %c0_i32, %c0_i32_0 : i32, i32
  }
  func.func @transform_3(%arg0: i32) -> (i32, i32) {
    %c0_i32 = arith.constant 0 : i32
    %c0_i32_0 = arith.constant 0 : i32
    %c0_i32_1 = arith.constant 0 : i32
    return %c0_i32, %c0_i32_0 : i32, i32
  }
  func.func @transform_4(%arg0: i32) -> (i32, i32) {
    %c0_i32 = arith.constant 0 : i32
    %c0_i32_0 = arith.constant 0 : i32
    %c0_i32_1 = arith.constant 0 : i32
    return %c0_i32, %c0_i32_0 : i32, i32
  }
  func.func @transform_5(%arg0: i32) -> (i32, i32) {
    %c0_i32 = arith.constant 0 : i32
    %c0_i32_0 = arith.constant 0 : i32
    return %arg0, %c0_i32 : i32, i32
  }
}

</mosaic_0001>

<llo_original>
// kernel: tpu_custom_call.1
$region0: #{tpu_custom_call.1}
  #allocation0 [shape = 'u32[]', space=smem, size = 0x4, offset = 0x4, fixed_abs, tag = 'smem constant byte address 0x4 - core index']
  #allocation1 [shape = 'u32[144,128]{1,0:T(1,128)}', space=vmem, size = 0x12000, scoped, tag = 'internal scratch']
  %s0 = inlined_call_operand.vmem [shape: f32[512,4], index: 0, kind: input, shape index: {}]
  %s1 = inlined_call_operand.vmem [shape: f32[4,128], index: 1, kind: input, shape index: {}]
  %s2 = inlined_call_operand.vmem [shape: f32[1,128], index: 2, kind: input, shape index: {}]
  %s3 = inlined_call_operand.vmem [shape: bf16[128,128], index: 3, kind: input, shape index: {}]
  %s4 = inlined_call_operand.vmem [shape: f32[1,128], index: 4, kind: input, shape index: {}]
  %s5 = inlined_call_operand.hbm [shape: bf16[512,128], index: 5, kind: output, shape index: {}]
  %s6 = sld [smem:[#allocation0]]
  $region53: #{tpu_custom_call.1} parent=0
    _
  %s8 = ssub.s32 1, %s6
  %s9 = scalar_select 0, %s8, %s6
  $region1: #{tpu_custom_call.1} parent=0
    #allocation2 [shape = 'u8[131072]{0}', space=vmem, size = 0x20000, scoped, tag = 'output window, operand 0']
    #allocation3 [shape = 's32[2]{0}', space=sflag, size = 0x8, scoped, tag = 'scoped memory for tpu_custom_call.1']
    %10 = vsyncpa [#allocation3], 0
    %s11 = scalar_lea.sflag [#allocation3], 1
    %12 = vsyncpa %s11, 0
    loop: start=0, step=1, limit=4
    $region2: #{tpu_custom_call.1} parent=1 // loop_pre_header
      _
    $region3: #{tpu_custom_call.1} parent=1 // loop_header
      %s14 = sphi 0, %s18
      %p15 = scmp.ge.s32.totalorder %s14, 4
      %s24 = sphi 0, %s26
      %s27 = sphi 0, %s24
      %s28 = sphi 0, %s27
      %s44 = sphi 0, %s28
      %s48 = sphi 0, %s48
      %s50 = sphi 0, %s48
      %s51 = sphi 0, %s50
      %s65 = sphi 0, %s51
      %s69 = sphi 0, %s69
      %s71 = sphi 0, %s69
      %s72 = sphi 0, %s71
      %s86 = sphi 0, %s72
      %s90 = sphi 0, %s90
      %s92 = sphi 0, %s90
      %s93 = sphi 0, %s92
      %s107 = sphi 0, %s93
      %s111 = sphi 0, %s111
      %s113 = sphi 0, %s111
      %s114 = sphi 0, %s113
      %s128 = sphi 0, %s114
      %s134 = sphi 0, %s136
      %s137 = sphi 0, %s134
      %s138 = sphi 0, %s137
      %s154 = sphi 0, %s138
    $region4: #{tpu_custom_call.1} parent=1 // loop_header_branch
      %17 = sbr.rel (%p15) target = $region8
    $region5: #{tpu_custom_call.1} parent=1 // loop_body
      %s19 = ssub.s32 %s14, 1
      %s20 = ssub.s32 %s14, 2
      %s21 = sadd.s32 %s14, 1
      %s22 = ssub.s32 %s14, %s21
      %p23 = scmp.eq.s32.totalorder %s22, 0
      %s25 = sadd.s32 %s24, 1
      %s26 = scalar_select %p23, %s24, %s25
      %p29 = pneg %p23
      %p30 = scmp.eq.s32.totalorder %s14, 1
      %p31 = por %p29, %p30
      %p32 = scmp.ne.s32.totalorder %s24, %s27
      %p33 = scmp.eq.s32.totalorder %s14, 0
      %p34 = por %p32, %p33
      %p35 = scmp.ne.s32.totalorder %s24, %s27
      %p36 = scmp.eq.s32.totalorder %s19, 1
      %p37 = por %p35, %p36
      %p38 = scmp.ne.s32.totalorder %s27, %s28
      %p39 = scmp.eq.s32.totalorder %s19, 0
      %p40 = por %p38, %p39
      %p41 = scmp.ne.s32.totalorder %s27, %s28
      %p42 = scmp.eq.s32.totalorder %s20, 1
      %p43 = por %p41, %p42
      %p45 = scmp.ne.s32.totalorder %s28, %s44
      %p46 = scmp.eq.s32.totalorder %s20, 0
      %p47 = por %p45, %p46
      %s49 = sadd.s32 %s48, 1
      %p52 = scmp.eq.s32.totalorder %s14, 1
      %p53 = scmp.ne.s32.totalorder %s48, %s50
      %p54 = scmp.eq.s32.totalorder %s14, 0
      %p55 = por %p53, %p54
      %p56 = scmp.ne.s32.totalorder %s48, %s50
      %p57 = scmp.eq.s32.totalorder %s19, 1
      %p58 = por %p56, %p57
      %p59 = scmp.ne.s32.totalorder %s50, %s51
      %p60 = scmp.eq.s32.totalorder %s19, 0
      %p61 = por %p59, %p60
      %p62 = scmp.ne.s32.totalorder %s50, %s51
      %p63 = scmp.eq.s32.totalorder %s20, 1
      %p64 = por %p62, %p63
      %p66 = scmp.ne.s32.totalorder %s51, %s65
      %p67 = scmp.eq.s32.totalorder %s20, 0
      %p68 = por %p66, %p67
      %s70 = sadd.s32 %s69, 1
      %p73 = scmp.eq.s32.totalorder %s14, 1
      %p74 = scmp.ne.s32.totalorder %s69, %s71
      %p75 = scmp.eq.s32.totalorder %s14, 0
      %p76 = por %p74, %p75
      %p77 = scmp.ne.s32.totalorder %s69, %s71
      %p78 = scmp.eq.s32.totalorder %s19, 1
      %p79 = por %p77, %p78
      %p80 = scmp.ne.s32.totalorder %s71, %s72
      %p81 = scmp.eq.s32.totalorder %s19, 0
      %p82 = por %p80, %p81
      %p83 = scmp.ne.s32.totalorder %s71, %s72
      %p84 = scmp.eq.s32.totalorder %s20, 1
      %p85 = por %p83, %p84
      %p87 = scmp.ne.s32.totalorder %s72, %s86
      %p88 = scmp.eq.s32.totalorder %s20, 0
      %p89 = por %p87, %p88
      %s91 = sadd.s32 %s90, 1
      %p94 = scmp.eq.s32.totalorder %s14, 1
      %p95 = scmp.ne.s32.totalorder %s90, %s92
      %p96 = scmp.eq.s32.totalorder %s14, 0
      %p97 = por %p95, %p96
      %p98 = scmp.ne.s32.totalorder %s90, %s92
      %p99 = scmp.eq.s32.totalorder %s19, 1
      %p100 = por %p98, %p99
      %p101 = scmp.ne.s32.totalorder %s92, %s93
      %p102 = scmp.eq.s32.totalorder %s19, 0
      %p103 = por %p101, %p102
      %p104 = scmp.ne.s32.totalorder %s92, %s93
      %p105 = scmp.eq.s32.totalorder %s20, 1
      %p106 = por %p104, %p105
      %p108 = scmp.ne.s32.totalorder %s93, %s107
      %p109 = scmp.eq.s32.totalorder %s20, 0
      %p110 = por %p108, %p109
      %s112 = sadd.s32 %s111, 1
      %p115 = scmp.eq.s32.totalorder %s14, 1
      %p116 = scmp.ne.s32.totalorder %s111, %s113
      %p117 = scmp.eq.s32.totalorder %s14, 0
      %p118 = por %p116, %p117
      %p119 = scmp.ne.s32.totalorder %s111, %s113
      %p120 = scmp.eq.s32.totalorder %s19, 1
      %p121 = por %p119, %p120
      %p122 = scmp.ne.s32.totalorder %s113, %s114
      %p123 = scmp.eq.s32.totalorder %s19, 0
      %p124 = por %p122, %p123
      %p125 = scmp.ne.s32.totalorder %s113, %s114
      %p126 = scmp.eq.s32.totalorder %s20, 1
      %p127 = por %p125, %p126
      %p129 = scmp.ne.s32.totalorder %s114, %s128
      %p130 = scmp.eq.s32.totalorder %s20, 0
      %p131 = por %p129, %p130
      %s132 = ssub.s32 %s14, %s21
      %p133 = scmp.eq.s32.totalorder %s132, 0
      %s135 = sadd.s32 %s134, 1
      %s136 = scalar_select %p133, %s134, %s135
      %p139 = pneg %p133
      %p140 = scmp.eq.s32.totalorder %s14, 1
      %p141 = por %p139, %p140
      %p142 = scmp.ne.s32.totalorder %s134, %s137
      %p143 = scmp.eq.s32.totalorder %s14, 0
      %p144 = por %p142, %p143
      %p145 = scmp.ne.s32.totalorder %s134, %s137
      %p146 = scmp.eq.s32.totalorder %s19, 1
      %p147 = por %p145, %p146
      %p148 = scmp.ne.s32.totalorder %s137, %s138
      %p149 = scmp.eq.s32.totalorder %s19, 0
      %p150 = por %p148, %p149
      %p151 = scmp.ne.s32.totalorder %s137, %s138
      %p152 = scmp.eq.s32.totalorder %s20, 1
      %p153 = por %p151, %p152
      %p155 = scmp.ne.s32.totalorder %s138, %s154
      %p156 = scmp.eq.s32.totalorder %s20, 0
      %p157 = por %p155, %p156
      %p158 = scmp.le.s32.totalorder 1, %s14
      %p159 = scmp.lt.s32.totalorder %s14, 3
      %p160 = pnand %p158, %p159
      %p161 = pneg %p160
      // Predicated region
      $region9: #{tpu_custom_call.1} parent=5 // pred_check
        _
      $region10: #{tpu_custom_call.1} parent=5 // pred_check_branch
        %163 = sbr.rel (%p160) target = $region12
      $region11: #{tpu_custom_call.1} parent=5 // pred_region
        %s164 = ssub.s32 %s14, 1
        // Predicated region
        $region13: #{tpu_custom_call.1} parent=11 // pred_check
          %p165 = pneg %p61
        $region14: #{tpu_custom_call.1} parent=11 // pred_check_branch
          %167 = sbr.rel (%p165) target = $region16
        $region15: #{tpu_custom_call.1} parent=11 // pred_region
          _
        $region16: #{tpu_custom_call.1} parent=11 // pred_fallthru
          _
        // Predicated region
        $region17: #{tpu_custom_call.1} parent=11 // pred_check
          %p168 = pneg %p82
        $region18: #{tpu_custom_call.1} parent=11 // pred_check_branch
          %170 = sbr.rel (%p168) target = $region20
        $region19: #{tpu_custom_call.1} parent=11 // pred_region
          _
        $region20: #{tpu_custom_call.1} parent=11 // pred_fallthru
          _
        // Predicated region
        $region21: #{tpu_custom_call.1} parent=11 // pred_check
          %p171 = pneg %p103
        $region22: #{tpu_custom_call.1} parent=11 // pred_check_branch
          %173 = sbr.rel (%p171) target = $region24
        $region23: #{tpu_custom_call.1} parent=11 // pred_region
          _
        $region24: #{tpu_custom_call.1} parent=11 // pred_fallthru
          _
        // Predicated region
        $region25: #{tpu_custom_call.1} parent=11 // pred_check
          %p174 = pneg %p124
        $region26: #{tpu_custom_call.1} parent=11 // pred_check_branch
          %176 = sbr.rel (%p174) target = $region28
        $region27: #{tpu_custom_call.1} parent=11 // pred_region
          _
        $region28: #{tpu_custom_call.1} parent=11 // pred_fallthru
          _
      $region12: #{tpu_custom_call.1} parent=5 // pred_fallthru
        _
      %p177 = scmp.lt.s32.totalorder %s14, 2
      // Predicated region
      $region29: #{tpu_custom_call.1} parent=5 // pred_check
        %p178 = pneg %p177
      $region30: #{tpu_custom_call.1} parent=5 // pred_check_branch
        %180 = sbr.rel (%p178) target = $region32
      $region31: #{tpu_custom_call.1} parent=5 // pred_region
        // Predicated region
        $region33: #{tpu_custom_call.1} parent=31 // pred_check
          %p181 = pneg %p34
        $region34: #{tpu_custom_call.1} parent=31 // pred_check_branch
          %183 = sbr.rel (%p181) target = $region36
        $region35: #{tpu_custom_call.1} parent=31 // pred_region
          %s184 = smul.u32 32, %s14
          %p185 = scmp.lt.s32.totalorder %s184, 63
          %s186 = scalar_select %p185, %s184, 63
          %s187 = smul.addr %s186, 8
          %s188 = scalar_lea.vmem %s0, %s187
          %s189 = smul.u32 32, %s14
        $region36: #{tpu_custom_call.1} parent=31 // pred_fallthru
          _
      $region32: #{tpu_custom_call.1} parent=5 // pred_fallthru
        _
      %p190 = scmp.le.s32.totalorder 1, %s14
      %p191 = scmp.lt.s32.totalorder %s14, 3
      %p192 = pnand %p190, %p191
      %p193 = pneg %p192
      // Predicated region
      $region37: #{tpu_custom_call.1} parent=5 // pred_check
        _
      $region38: #{tpu_custom_call.1} parent=5 // pred_check_branch
        %195 = sbr.rel (%p192) target = $region40
      $region39: #{tpu_custom_call.1} parent=5 // pred_region
        %s196 = ssub.s32 %s14, 1
        %s197 = smul.u32 32, %s19
        %p198 = scmp.lt.s32.totalorder %s197, 63
        %s199 = scalar_select %p198, %s197, 63
        %s200 = smul.addr %s199, 8
        %s201 = scalar_lea.vmem %s0, %s200
        %p202 = pneg %p40
        %p203 = pneg %p37
        %p204 = pneg %p61
        %p205 = pneg %p58
        %p206 = pneg %p82
        %p207 = pneg %p79
        %p208 = pneg %p103
        %p209 = pneg %p100
        %p210 = pneg %p124
        %p211 = pneg %p121
        %p212 = pneg %p150
        %p213 = pneg %p147
        %s214 = sand.u32 %s137, 1
        %s215 = scalar_lea.sflag [#allocation3], %s214
        %s216 = sand.u32 %s137, 1
        %s217 = smul.addr %s216, 128
        %s218 = scalar_lea.vmem [#allocation2], %s217
        %s219 = smul.u32 32, %s19
        %p220 = scmp.lt.s32.totalorder %s219, 63
        %s221 = scalar_select %p220, %s219, 63
        %s222 = smul.addr %s221, 8
        %s223 = scalar_lea.vmem %s0, %s222
        %s224 = smul.u32 32, %s19
        %s225 = smul.u32 32, %s19
        %v227 = vld [vmem:[%s223] sm:$0xff]
        %v228 = vld [vmem:[%s223 + $0x8] sm:$0xff]
        %v229 = vld [vmem:[%s223 + $0x10] sm:$0xff]
        %v230 = vld [vmem:[%s223 + $0x18] sm:$0xff]
        %v231 = vld [vmem:[%s223 + $0x20] sm:$0xff]
        %v232 = vld [vmem:[%s223 + $0x28] sm:$0xff]
        %v233 = vld [vmem:[%s223 + $0x30] sm:$0xff]
        %v234 = vld [vmem:[%s223 + $0x38] sm:$0xff]
        %v235 = vld [vmem:[%s223 + $0x40] sm:$0xff]
        %v236 = vld [vmem:[%s223 + $0x48] sm:$0xff]
        %v237 = vld [vmem:[%s223 + $0x50] sm:$0xff]
        %v238 = vld [vmem:[%s223 + $0x58] sm:$0xff]
        %v239 = vld [vmem:[%s223 + $0x60] sm:$0xff]
        %v240 = vld [vmem:[%s223 + $0x68] sm:$0xff]
        %v241 = vld [vmem:[%s223 + $0x70] sm:$0xff]
        %v242 = vld [vmem:[%s223 + $0x78] sm:$0xff]
        %v243 = vld [vmem:[%s223 + $0x80] sm:$0xff]
        %v244 = vld [vmem:[%s223 + $0x88] sm:$0xff]
        %v245 = vld [vmem:[%s223 + $0x90] sm:$0xff]
        %v246 = vld [vmem:[%s223 + $0x98] sm:$0xff]
        %v247 = vld [vmem:[%s223 + $0xa0] sm:$0xff]
        %v248 = vld [vmem:[%s223 + $0xa8] sm:$0xff]
        %v249 = vld [vmem:[%s223 + $0xb0] sm:$0xff]
        %v250 = vld [vmem:[%s223 + $0xb8] sm:$0xff]
        %v251 = vld [vmem:[%s223 + $0xc0] sm:$0xff]
        %v252 = vld [vmem:[%s223 + $0xc8] sm:$0xff]
        %v253 = vld [vmem:[%s223 + $0xd0] sm:$0xff]
        %v254 = vld [vmem:[%s223 + $0xd8] sm:$0xff]
        %v255 = vld [vmem:[%s223 + $0xe0] sm:$0xff]
        %v256 = vld [vmem:[%s223 + $0xe8] sm:$0xff]
        %v257 = vld [vmem:[%s223 + $0xf0] sm:$0xff]
        %v258 = vld [vmem:[%s223 + $0xf8] sm:$0xff]
        %v259 = vld [vmem:[%s1] sm:$0xf]
        %261 = vset.pattern.permute.xlu0 0
        %262 = vperm.xlu0 %261, %v227
        %v263 = vpop.permute.xlu0 %262
        %266 = vset.pattern.permute.xlu0 0
        %267 = vperm.xlu0 %266, %v228
        %v268 = vpop.permute.xlu0 %267
        %271 = vset.pattern.permute.xlu0 0
        %272 = vperm.xlu0 %271, %v229
        %v273 = vpop.permute.xlu0 %272
        %276 = vset.pattern.permute.xlu0 0
        %277 = vperm.xlu0 %276, %v230
        %v278 = vpop.permute.xlu0 %277
        %281 = vset.pattern.permute.xlu0 0
        %282 = vperm.xlu0 %281, %v231
        %v283 = vpop.permute.xlu0 %282
        %286 = vset.pattern.permute.xlu0 0
        %287 = vperm.xlu0 %286, %v232
        %v288 = vpop.permute.xlu0 %287
        %291 = vset.pattern.permute.xlu0 0
        %292 = vperm.xlu0 %291, %v233
        %v293 = vpop.permute.xlu0 %292
        %296 = vset.pattern.permute.xlu0 0
        %297 = vperm.xlu0 %296, %v234
        %v298 = vpop.permute.xlu0 %297
        %301 = vset.pattern.permute.xlu0 0
        %302 = vperm.xlu0 %301, %v235
        %v303 = vpop.permute.xlu0 %302
        %306 = vset.pattern.permute.xlu0 0
        %307 = vperm.xlu0 %306, %v236
        %v308 = vpop.permute.xlu0 %307
        %311 = vset.pattern.permute.xlu0 0
        %312 = vperm.xlu0 %311, %v237
        %v313 = vpop.permute.xlu0 %312
        %316 = vset.pattern.permute.xlu0 0
        %317 = vperm.xlu0 %316, %v238
        %v318 = vpop.permute.xlu0 %317
        %321 = vset.pattern.permute.xlu0 0
        %322 = vperm.xlu0 %321, %v239
        %v323 = vpop.permute.xlu0 %322
        %326 = vset.pattern.permute.xlu0 0
        %327 = vperm.xlu0 %326, %v240
        %v328 = vpop.permute.xlu0 %327
        %331 = vset.pattern.permute.xlu0 0
        %332 = vperm.xlu0 %331, %v241
        %v333 = vpop.permute.xlu0 %332
        %336 = vset.pattern.permute.xlu0 0
        %337 = vperm.xlu0 %336, %v242
        %v338 = vpop.permute.xlu0 %337
        %341 = vset.pattern.permute.xlu0 0
        %342 = vperm.xlu0 %341, %v243
        %v343 = vpop.permute.xlu0 %342
        %346 = vset.pattern.permute.xlu0 0
        %347 = vperm.xlu0 %346, %v244
        %v348 = vpop.permute.xlu0 %347
        %351 = vset.pattern.permute.xlu0 0
        %352 = vperm.xlu0 %351, %v245
        %v353 = vpop.permute.xlu0 %352
        %356 = vset.pattern.permute.xlu0 0
        %357 = vperm.xlu0 %356, %v246
        %v358 = vpop.permute.xlu0 %357
        %361 = vset.pattern.permute.xlu0 0
        %362 = vperm.xlu0 %361, %v247
        %v363 = vpop.permute.xlu0 %362
        %366 = vset.pattern.permute.xlu0 0
        %367 = vperm.xlu0 %366, %v248
        %v368 = vpop.permute.xlu0 %367
        %371 = vset.pattern.permute.xlu0 0
        %372 = vperm.xlu0 %371, %v249
        %v373 = vpop.permute.xlu0 %372
        %376 = vset.pattern.permute.xlu0 0
        %377 = vperm.xlu0 %376, %v250
        %v378 = vpop.permute.xlu0 %377
        %381 = vset.pattern.permute.xlu0 0
        %382 = vperm.xlu0 %381, %v251
        %v383 = vpop.permute.xlu0 %382
        %386 = vset.pattern.permute.xlu0 0
        %387 = vperm.xlu0 %386, %v252
        %v388 = vpop.permute.xlu0 %387
        %391 = vset.pattern.permute.xlu0 0
        %392 = vperm.xlu0 %391, %v253
        %v393 = vpop.permute.xlu0 %392
        %396 = vset.pattern.permute.xlu0 0
        %397 = vperm.xlu0 %396, %v254
        %v398 = vpop.permute.xlu0 %397
        %401 = vset.pattern.permute.xlu0 0
        %402 = vperm.xlu0 %401, %v255
        %v403 = vpop.permute.xlu0 %402
        %406 = vset.pattern.permute.xlu0 0
        %407 = vperm.xlu0 %406, %v256
        %v408 = vpop.permute.xlu0 %407
        %411 = vset.pattern.permute.xlu0 0
        %412 = vperm.xlu0 %411, %v257
        %v413 = vpop.permute.xlu0 %412
        %416 = vset.pattern.permute.xlu0 0
        %417 = vperm.xlu0 %416, %v258
        %v418 = vpop.permute.xlu0 %417
        %v420 = vlaneseq
        %v421 = vshrl.u32 %v420, 7
        %v422 = vsub.s32 0, %v421
        %v423 = vrot.slane %v259, %v422
        %v424 = vmul.f32 %v263, %v423
        %v425 = vmul.f32 %v268, %v423
        %v426 = vmul.f32 %v273, %v423
        %v427 = vmul.f32 %v278, %v423
        %v428 = vmul.f32 %v283, %v423
        %v429 = vmul.f32 %v288, %v423
        %v430 = vmul.f32 %v293, %v423
        %v431 = vmul.f32 %v298, %v423
        %v432 = vmul.f32 %v303, %v423
        %v433 = vmul.f32 %v308, %v423
        %v434 = vmul.f32 %v313, %v423
        %v435 = vmul.f32 %v318, %v423
        %v436 = vmul.f32 %v323, %v423
        %v437 = vmul.f32 %v328, %v423
        %v438 = vmul.f32 %v333, %v423
        %v439 = vmul.f32 %v338, %v423
        %v440 = vmul.f32 %v343, %v423
        %v441 = vmul.f32 %v348, %v423
        %v442 = vmul.f32 %v353, %v423
        %v443 = vmul.f32 %v358, %v423
        %v444 = vmul.f32 %v363, %v423
        %v445 = vmul.f32 %v368, %v423
        %v446 = vmul.f32 %v373, %v423
        %v447 = vmul.f32 %v378, %v423
        %v448 = vmul.f32 %v383, %v423
        %v449 = vmul.f32 %v388, %v423
        %v450 = vmul.f32 %v393, %v423
        %v451 = vmul.f32 %v398, %v423
        %v452 = vmul.f32 %v403, %v423
        %v453 = vmul.f32 %v408, %v423
        %v454 = vmul.f32 %v413, %v423
        %v455 = vmul.f32 %v418, %v423
        %456 = vset.pattern.permute.xlu0 1
        %457 = vperm.xlu0 %456, %v227
        %v458 = vpop.permute.xlu0 %457
        %460 = vset.pattern.permute.xlu0 1
        %461 = vperm.xlu0 %460, %v228
        %v462 = vpop.permute.xlu0 %461
        %464 = vset.pattern.permute.xlu0 1
        %465 = vperm.xlu0 %464, %v229
        %v466 = vpop.permute.xlu0 %465
        %468 = vset.pattern.permute.xlu0 1
        %469 = vperm.xlu0 %468, %v230
        %v470 = vpop.permute.xlu0 %469
        %472 = vset.pattern.permute.xlu0 1
        %473 = vperm.xlu0 %472, %v231
        %v474 = vpop.permute.xlu0 %473
        %476 = vset.pattern.permute.xlu0 1
        %477 = vperm.xlu0 %476, %v232
        %v478 = vpop.permute.xlu0 %477
        %480 = vset.pattern.permute.xlu0 1
        %481 = vperm.xlu0 %480, %v233
        %v482 = vpop.permute.xlu0 %481
        %484 = vset.pattern.permute.xlu0 1
        %485 = vperm.xlu0 %484, %v234
        %v486 = vpop.permute.xlu0 %485
        %488 = vset.pattern.permute.xlu0 1
        %489 = vperm.xlu0 %488, %v235
        %v490 = vpop.permute.xlu0 %489
        %492 = vset.pattern.permute.xlu0 1
        %493 = vperm.xlu0 %492, %v236
        %v494 = vpop.permute.xlu0 %493
        %496 = vset.pattern.permute.xlu0 1
        %497 = vperm.xlu0 %496, %v237
        %v498 = vpop.permute.xlu0 %497
        %500 = vset.pattern.permute.xlu0 1
        %501 = vperm.xlu0 %500, %v238
        %v502 = vpop.permute.xlu0 %501
        %504 = vset.pattern.permute.xlu0 1
        %505 = vperm.xlu0 %504, %v239
        %v506 = vpop.permute.xlu0 %505
        %508 = vset.pattern.permute.xlu0 1
        %509 = vperm.xlu0 %508, %v240
        %v510 = vpop.permute.xlu0 %509
        %512 = vset.pattern.permute.xlu0 1
        %513 = vperm.xlu0 %512, %v241
        %v514 = vpop.permute.xlu0 %513
        %516 = vset.pattern.permute.xlu0 1
        %517 = vperm.xlu0 %516, %v242
        %v518 = vpop.permute.xlu0 %517
        %520 = vset.pattern.permute.xlu0 1
        %521 = vperm.xlu0 %520, %v243
        %v522 = vpop.permute.xlu0 %521
        %524 = vset.pattern.permute.xlu0 1
        %525 = vperm.xlu0 %524, %v244
        %v526 = vpop.permute.xlu0 %525
        %528 = vset.pattern.permute.xlu0 1
        %529 = vperm.xlu0 %528, %v245
        %v530 = vpop.permute.xlu0 %529
        %532 = vset.pattern.permute.xlu0 1
        %533 = vperm.xlu0 %532, %v246
        %v534 = vpop.permute.xlu0 %533
        %536 = vset.pattern.permute.xlu0 1
        %537 = vperm.xlu0 %536, %v247
        %v538 = vpop.permute.xlu0 %537
        %540 = vset.pattern.permute.xlu0 1
        %541 = vperm.xlu0 %540, %v248
        %v542 = vpop.permute.xlu0 %541
        %544 = vset.pattern.permute.xlu0 1
        %545 = vperm.xlu0 %544, %v249
        %v546 = vpop.permute.xlu0 %545
        %548 = vset.pattern.permute.xlu0 1
        %549 = vperm.xlu0 %548, %v250
        %v550 = vpop.permute.xlu0 %549
        %552 = vset.pattern.permute.xlu0 1
        %553 = vperm.xlu0 %552, %v251
        %v554 = vpop.permute.xlu0 %553
        %556 = vset.pattern.permute.xlu0 1
        %557 = vperm.xlu0 %556, %v252
        %v558 = vpop.permute.xlu0 %557
        %560 = vset.pattern.permute.xlu0 1
        %561 = vperm.xlu0 %560, %v253
        %v562 = vpop.permute.xlu0 %561
        %564 = vset.pattern.permute.xlu0 1
        %565 = vperm.xlu0 %564, %v254
        %v566 = vpop.permute.xlu0 %565
        %568 = vset.pattern.permute.xlu0 1
        %569 = vperm.xlu0 %568, %v255
        %v570 = vpop.permute.xlu0 %569
        %572 = vset.pattern.permute.xlu0 1
        %573 = vperm.xlu0 %572, %v256
        %v574 = vpop.permute.xlu0 %573
        %576 = vset.pattern.permute.xlu0 1
        %577 = vperm.xlu0 %576, %v257
        %v578 = vpop.permute.xlu0 %577
        %580 = vset.pattern.permute.xlu0 1
        %581 = vperm.xlu0 %580, %v258
        %v582 = vpop.permute.xlu0 %581
        %v584 = vlaneseq
        %v585 = vshrl.u32 %v584, 7
        %v586 = vsub.s32 1, %v585
        %v587 = vrot.slane %v259, %v586
        %v588 = vmul.f32 %v458, %v587
        %v589 = vmul.f32 %v462, %v587
        %v590 = vmul.f32 %v466, %v587
        %v591 = vmul.f32 %v470, %v587
        %v592 = vmul.f32 %v474, %v587
        %v593 = vmul.f32 %v478, %v587
        %v594 = vmul.f32 %v482, %v587
        %v595 = vmul.f32 %v486, %v587
        %v596 = vmul.f32 %v490, %v587
        %v597 = vmul.f32 %v494, %v587
        %v598 = vmul.f32 %v498, %v587
        %v599 = vmul.f32 %v502, %v587
        %v600 = vmul.f32 %v506, %v587
        %v601 = vmul.f32 %v510, %v587
        %v602 = vmul.f32 %v514, %v587
        %v603 = vmul.f32 %v518, %v587
        %v604 = vmul.f32 %v522, %v587
        %v605 = vmul.f32 %v526, %v587
        %v606 = vmul.f32 %v530, %v587
        %v607 = vmul.f32 %v534, %v587
        %v608 = vmul.f32 %v538, %v587
        %v609 = vmul.f32 %v542, %v587
        %v610 = vmul.f32 %v546, %v587
        %v611 = vmul.f32 %v550, %v587
        %v612 = vmul.f32 %v554, %v587
        %v613 = vmul.f32 %v558, %v587
        %v614 = vmul.f32 %v562, %v587
        %v615 = vmul.f32 %v566, %v587
        %v616 = vmul.f32 %v570, %v587
        %v617 = vmul.f32 %v574, %v587
        %v618 = vmul.f32 %v578, %v587
        %v619 = vmul.f32 %v582, %v587
        %v620 = vadd.f32 %v424, %v588
        %v621 = vadd.f32 %v425, %v589
        %v622 = vadd.f32 %v426, %v590
        %v623 = vadd.f32 %v427, %v591
        %v624 = vadd.f32 %v428, %v592
        %v625 = vadd.f32 %v429, %v593
        %v626 = vadd.f32 %v430, %v594
        %v627 = vadd.f32 %v431, %v595
        %v628 = vadd.f32 %v432, %v596
        %v629 = vadd.f32 %v433, %v597
        %v630 = vadd.f32 %v434, %v598
        %v631 = vadd.f32 %v435, %v599
        %v632 = vadd.f32 %v436, %v600
        %v633 = vadd.f32 %v437, %v601
        %v634 = vadd.f32 %v438, %v602
        %v635 = vadd.f32 %v439, %v603
        %v636 = vadd.f32 %v440, %v604
        %v637 = vadd.f32 %v441, %v605
        %v638 = vadd.f32 %v442, %v606
        %v639 = vadd.f32 %v443, %v607
        %v640 = vadd.f32 %v444, %v608
        %v641 = vadd.f32 %v445, %v609
        %v642 = vadd.f32 %v446, %v610
        %v643 = vadd.f32 %v447, %v611
        %v644 = vadd.f32 %v448, %v612
        %v645 = vadd.f32 %v449, %v613
        %v646 = vadd.f32 %v450, %v614
        %v647 = vadd.f32 %v451, %v615
        %v648 = vadd.f32 %v452, %v616
        %v649 = vadd.f32 %v453, %v617
        %v650 = vadd.f32 %v454, %v618
        %v651 = vadd.f32 %v455, %v619
        %652 = vset.pattern.permute.xlu0 2
        %653 = vperm.xlu0 %652, %v227
        %v654 = vpop.permute.xlu0 %653
        %656 = vset.pattern.permute.xlu0 2
        %657 = vperm.xlu0 %656, %v228
        %v658 = vpop.permute.xlu0 %657
        %660 = vset.pattern.permute.xlu0 2
        %661 = vperm.xlu0 %660, %v229
        %v662 = vpop.permute.xlu0 %661
        %664 = vset.pattern.permute.xlu0 2
        %665 = vperm.xlu0 %664, %v230
        %v666 = vpop.permute.xlu0 %665
        %668 = vset.pattern.permute.xlu0 2
        %669 = vperm.xlu0 %668, %v231
        %v670 = vpop.permute.xlu0 %669
        %672 = vset.pattern.permute.xlu0 2
        %673 = vperm.xlu0 %672, %v232
        %v674 = vpop.permute.xlu0 %673
        %676 = vset.pattern.permute.xlu0 2
        %677 = vperm.xlu0 %676, %v233
        %v678 = vpop.permute.xlu0 %677
        %680 = vset.pattern.permute.xlu0 2
        %681 = vperm.xlu0 %680, %v234
        %v682 = vpop.permute.xlu0 %681
        %684 = vset.pattern.permute.xlu0 2
        %685 = vperm.xlu0 %684, %v235
        %v686 = vpop.permute.xlu0 %685
        %688 = vset.pattern.permute.xlu0 2
        %689 = vperm.xlu0 %688, %v236
        %v690 = vpop.permute.xlu0 %689
        %692 = vset.pattern.permute.xlu0 2
        %693 = vperm.xlu0 %692, %v237
        %v694 = vpop.permute.xlu0 %693
        %696 = vset.pattern.permute.xlu0 2
        %697 = vperm.xlu0 %696, %v238
        %v698 = vpop.permute.xlu0 %697
        %700 = vset.pattern.permute.xlu0 2
        %701 = vperm.xlu0 %700, %v239
        %v702 = vpop.permute.xlu0 %701
        %704 = vset.pattern.permute.xlu0 2
        %705 = vperm.xlu0 %704, %v240
        %v706 = vpop.permute.xlu0 %705
        %708 = vset.pattern.permute.xlu0 2
        %709 = vperm.xlu0 %708, %v241
        %v710 = vpop.permute.xlu0 %709
        %712 = vset.pattern.permute.xlu0 2
        %713 = vperm.xlu0 %712, %v242
        %v714 = vpop.permute.xlu0 %713
        %716 = vset.pattern.permute.xlu0 2
        %717 = vperm.xlu0 %716, %v243
        %v718 = vpop.permute.xlu0 %717
        %720 = vset.pattern.permute.xlu0 2
        %721 = vperm.xlu0 %720, %v244
        %v722 = vpop.permute.xlu0 %721
        %724 = vset.pattern.permute.xlu0 2
        %725 = vperm.xlu0 %724, %v245
        %v726 = vpop.permute.xlu0 %725
        %728 = vset.pattern.permute.xlu0 2
        %729 = vperm.xlu0 %728, %v246
        %v730 = vpop.permute.xlu0 %729
        %732 = vset.pattern.permute.xlu0 2
        %733 = vperm.xlu0 %732, %v247
        %v734 = vpop.permute.xlu0 %733
        %736 = vset.pattern.permute.xlu0 2
        %737 = vperm.xlu0 %736, %v248
        %v738 = vpop.permute.xlu0 %737
        %740 = vset.pattern.permute.xlu0 2
        %741 = vperm.xlu0 %740, %v249
        %v742 = vpop.permute.xlu0 %741
        %744 = vset.pattern.permute.xlu0 2
        %745 = vperm.xlu0 %744, %v250
        %v746 = vpop.permute.xlu0 %745
        %748 = vset.pattern.permute.xlu0 2
        %749 = vperm.xlu0 %748, %v251
        %v750 = vpop.permute.xlu0 %749
        %752 = vset.pattern.permute.xlu0 2
        %753 = vperm.xlu0 %752, %v252
        %v754 = vpop.permute.xlu0 %753
        %756 = vset.pattern.permute.xlu0 2
        %757 = vperm.xlu0 %756, %v253
        %v758 = vpop.permute.xlu0 %757
        %760 = vset.pattern.permute.xlu0 2
        %761 = vperm.xlu0 %760, %v254
        %v762 = vpop.permute.xlu0 %761
        %764 = vset.pattern.permute.xlu0 2
        %765 = vperm.xlu0 %764, %v255
        %v766 = vpop.permute.xlu0 %765
        %768 = vset.pattern.permute.xlu0 2
        %769 = vperm.xlu0 %768, %v256
        %v770 = vpop.permute.xlu0 %769
        %772 = vset.pattern.permute.xlu0 2
        %773 = vperm.xlu0 %772, %v257
        %v774 = vpop.permute.xlu0 %773
        %776 = vset.pattern.permute.xlu0 2
        %777 = vperm.xlu0 %776, %v258
        %v778 = vpop.permute.xlu0 %777
        %v780 = vlaneseq
        %v781 = vshrl.u32 %v780, 7
        %v782 = vsub.s32 2, %v781
        %v783 = vrot.slane %v259, %v782
        %v784 = vmul.f32 %v654, %v783
        %v785 = vmul.f32 %v658, %v783
        %v786 = vmul.f32 %v662, %v783
        %v787 = vmul.f32 %v666, %v783
        %v788 = vmul.f32 %v670, %v783
        %v789 = vmul.f32 %v674, %v783
        %v790 = vmul.f32 %v678, %v783
        %v791 = vmul.f32 %v682, %v783
        %v792 = vmul.f32 %v686, %v783
        %v793 = vmul.f32 %v690, %v783
        %v794 = vmul.f32 %v694, %v783
        %v795 = vmul.f32 %v698, %v783
        %v796 = vmul.f32 %v702, %v783
        %v797 = vmul.f32 %v706, %v783
        %v798 = vmul.f32 %v710, %v783
        %v799 = vmul.f32 %v714, %v783
        %v800 = vmul.f32 %v718, %v783
        %v801 = vmul.f32 %v722, %v783
        %v802 = vmul.f32 %v726, %v783
        %v803 = vmul.f32 %v730, %v783
        %v804 = vmul.f32 %v734, %v783
        %v805 = vmul.f32 %v738, %v783
        %v806 = vmul.f32 %v742, %v783
        %v807 = vmul.f32 %v746, %v783
        %v808 = vmul.f32 %v750, %v783
        %v809 = vmul.f32 %v754, %v783
        %v810 = vmul.f32 %v758, %v783
        %v811 = vmul.f32 %v762, %v783
        %v812 = vmul.f32 %v766, %v783
        %v813 = vmul.f32 %v770, %v783
        %v814 = vmul.f32 %v774, %v783
        %v815 = vmul.f32 %v778, %v783
        %v816 = vadd.f32 %v620, %v784
        %v817 = vadd.f32 %v621, %v785
        %v818 = vadd.f32 %v622, %v786
        %v819 = vadd.f32 %v623, %v787
        %v820 = vadd.f32 %v624, %v788
        %v821 = vadd.f32 %v625, %v789
        %v822 = vadd.f32 %v626, %v790
        %v823 = vadd.f32 %v627, %v791
        %v824 = vadd.f32 %v628, %v792
        %v825 = vadd.f32 %v629, %v793
        %v826 = vadd.f32 %v630, %v794
        %v827 = vadd.f32 %v631, %v795
        %v828 = vadd.f32 %v632, %v796
        %v829 = vadd.f32 %v633, %v797
        %v830 = vadd.f32 %v634, %v798
        %v831 = vadd.f32 %v635, %v799
        %v832 = vadd.f32 %v636, %v800
        %v833 = vadd.f32 %v637, %v801
        %v834 = vadd.f32 %v638, %v802
        %v835 = vadd.f32 %v639, %v803
        %v836 = vadd.f32 %v640, %v804
        %v837 = vadd.f32 %v641, %v805
        %v838 = vadd.f32 %v642, %v806
        %v839 = vadd.f32 %v643, %v807
        %v840 = vadd.f32 %v644, %v808
        %v841 = vadd.f32 %v645, %v809
        %v842 = vadd.f32 %v646, %v810
        %v843 = vadd.f32 %v647, %v811
        %v844 = vadd.f32 %v648, %v812
        %v845 = vadd.f32 %v649, %v813
        %v846 = vadd.f32 %v650, %v814
        %v847 = vadd.f32 %v651, %v815
        %848 = vset.pattern.permute.xlu0 3
        %849 = vperm.xlu0 %848, %v227
        %v850 = vpop.permute.xlu0 %849
        %852 = vset.pattern.permute.xlu0 3
        %853 = vperm.xlu0 %852, %v228
        %v854 = vpop.permute.xlu0 %853
        %856 = vset.pattern.permute.xlu0 3
        %857 = vperm.xlu0 %856, %v229
        %v858 = vpop.permute.xlu0 %857
        %860 = vset.pattern.permute.xlu0 3
        %861 = vperm.xlu0 %860, %v230
        %v862 = vpop.permute.xlu0 %861
        %864 = vset.pattern.permute.xlu0 3
        %865 = vperm.xlu0 %864, %v231
        %v866 = vpop.permute.xlu0 %865
        %868 = vset.pattern.permute.xlu0 3
        %869 = vperm.xlu0 %868, %v232
        %v870 = vpop.permute.xlu0 %869
        %872 = vset.pattern.permute.xlu0 3
        %873 = vperm.xlu0 %872, %v233
        %v874 = vpop.permute.xlu0 %873
        %876 = vset.pattern.permute.xlu0 3
        %877 = vperm.xlu0 %876, %v234
        %v878 = vpop.permute.xlu0 %877
        %880 = vset.pattern.permute.xlu0 3
        %881 = vperm.xlu0 %880, %v235
        %v882 = vpop.permute.xlu0 %881
        %884 = vset.pattern.permute.xlu0 3
        %885 = vperm.xlu0 %884, %v236
        %v886 = vpop.permute.xlu0 %885
        %888 = vset.pattern.permute.xlu0 3
        %889 = vperm.xlu0 %888, %v237
        %v890 = vpop.permute.xlu0 %889
        %892 = vset.pattern.permute.xlu0 3
        %893 = vperm.xlu0 %892, %v238
        %v894 = vpop.permute.xlu0 %893
        %896 = vset.pattern.permute.xlu0 3
        %897 = vperm.xlu0 %896, %v239
        %v898 = vpop.permute.xlu0 %897
        %900 = vset.pattern.permute.xlu0 3
        %901 = vperm.xlu0 %900, %v240
        %v902 = vpop.permute.xlu0 %901
        %904 = vset.pattern.permute.xlu0 3
        %905 = vperm.xlu0 %904, %v241
        %v906 = vpop.permute.xlu0 %905
        %908 = vset.pattern.permute.xlu0 3
        %909 = vperm.xlu0 %908, %v242
        %v910 = vpop.permute.xlu0 %909
        %912 = vset.pattern.permute.xlu0 3
        %913 = vperm.xlu0 %912, %v243
        %v914 = vpop.permute.xlu0 %913
        %916 = vset.pattern.permute.xlu0 3
        %917 = vperm.xlu0 %916, %v244
        %v918 = vpop.permute.xlu0 %917
        %920 = vset.pattern.permute.xlu0 3
        %921 = vperm.xlu0 %920, %v245
        %v922 = vpop.permute.xlu0 %921
        %924 = vset.pattern.permute.xlu0 3
        %925 = vperm.xlu0 %924, %v246
        %v926 = vpop.permute.xlu0 %925
        %928 = vset.pattern.permute.xlu0 3
        %929 = vperm.xlu0 %928, %v247
        %v930 = vpop.permute.xlu0 %929
        %932 = vset.pattern.permute.xlu0 3
        %933 = vperm.xlu0 %932, %v248
        %v934 = vpop.permute.xlu0 %933
        %936 = vset.pattern.permute.xlu0 3
        %937 = vperm.xlu0 %936, %v249
        %v938 = vpop.permute.xlu0 %937
        %940 = vset.pattern.permute.xlu0 3
        %941 = vperm.xlu0 %940, %v250
        %v942 = vpop.permute.xlu0 %941
        %944 = vset.pattern.permute.xlu0 3
        %945 = vperm.xlu0 %944, %v251
        %v946 = vpop.permute.xlu0 %945
        %948 = vset.pattern.permute.xlu0 3
        %949 = vperm.xlu0 %948, %v252
        %v950 = vpop.permute.xlu0 %949
        %952 = vset.pattern.permute.xlu0 3
        %953 = vperm.xlu0 %952, %v253
        %v954 = vpop.permute.xlu0 %953
        %956 = vset.pattern.permute.xlu0 3
        %957 = vperm.xlu0 %956, %v254
        %v958 = vpop.permute.xlu0 %957
        %960 = vset.pattern.permute.xlu0 3
        %961 = vperm.xlu0 %960, %v255
        %v962 = vpop.permute.xlu0 %961
        %964 = vset.pattern.permute.xlu0 3
        %965 = vperm.xlu0 %964, %v256
        %v966 = vpop.permute.xlu0 %965
        %968 = vset.pattern.permute.xlu0 3
        %969 = vperm.xlu0 %968, %v257
        %v970 = vpop.permute.xlu0 %969
        %972 = vset.pattern.permute.xlu0 3
        %973 = vperm.xlu0 %972, %v258
        %v974 = vpop.permute.xlu0 %973
        %v976 = vlaneseq
        %v977 = vshrl.u32 %v976, 7
        %v978 = vsub.s32 3, %v977
        %v979 = vrot.slane %v259, %v978
        %v980 = vmul.f32 %v850, %v979
        %v981 = vmul.f32 %v854, %v979
        %v982 = vmul.f32 %v858, %v979
        %v983 = vmul.f32 %v862, %v979
        %v984 = vmul.f32 %v866, %v979
        %v985 = vmul.f32 %v870, %v979
        %v986 = vmul.f32 %v874, %v979
        %v987 = vmul.f32 %v878, %v979
        %v988 = vmul.f32 %v882, %v979
        %v989 = vmul.f32 %v886, %v979
        %v990 = vmul.f32 %v890, %v979
        %v991 = vmul.f32 %v894, %v979
        %v992 = vmul.f32 %v898, %v979
        %v993 = vmul.f32 %v902, %v979
        %v994 = vmul.f32 %v906, %v979
        %v995 = vmul.f32 %v910, %v979
        %v996 = vmul.f32 %v914, %v979
        %v997 = vmul.f32 %v918, %v979
        %v998 = vmul.f32 %v922, %v979
        %v999 = vmul.f32 %v926, %v979
        %v1000 = vmul.f32 %v930, %v979
        %v1001 = vmul.f32 %v934, %v979
        %v1002 = vmul.f32 %v938, %v979
        %v1003 = vmul.f32 %v942, %v979
        %v1004 = vmul.f32 %v946, %v979
        %v1005 = vmul.f32 %v950, %v979
        %v1006 = vmul.f32 %v954, %v979
        %v1007 = vmul.f32 %v958, %v979
        %v1008 = vmul.f32 %v962, %v979
        %v1009 = vmul.f32 %v966, %v979
        %v1010 = vmul.f32 %v970, %v979
        %v1011 = vmul.f32 %v974, %v979
        %v1012 = vadd.f32 %v816, %v980
        %v1013 = vadd.f32 %v817, %v981
        %v1014 = vadd.f32 %v818, %v982
        %v1015 = vadd.f32 %v819, %v983
        %v1016 = vadd.f32 %v820, %v984
        %v1017 = vadd.f32 %v821, %v985
        %v1018 = vadd.f32 %v822, %v986
        %v1019 = vadd.f32 %v823, %v987
        %v1020 = vadd.f32 %v824, %v988
        %v1021 = vadd.f32 %v825, %v989
        %v1022 = vadd.f32 %v826, %v990
        %v1023 = vadd.f32 %v827, %v991
        %v1024 = vadd.f32 %v828, %v992
        %v1025 = vadd.f32 %v829, %v993
        %v1026 = vadd.f32 %v830, %v994
        %v1027 = vadd.f32 %v831, %v995
        %v1028 = vadd.f32 %v832, %v996
        %v1029 = vadd.f32 %v833, %v997
        %v1030 = vadd.f32 %v834, %v998
        %v1031 = vadd.f32 %v835, %v999
        %v1032 = vadd.f32 %v836, %v1000
        %v1033 = vadd.f32 %v837, %v1001
        %v1034 = vadd.f32 %v838, %v1002
        %v1035 = vadd.f32 %v839, %v1003
        %v1036 = vadd.f32 %v840, %v1004
        %v1037 = vadd.f32 %v841, %v1005
        %v1038 = vadd.f32 %v842, %v1006
        %v1039 = vadd.f32 %v843, %v1007
        %v1040 = vadd.f32 %v844, %v1008
        %v1041 = vadd.f32 %v845, %v1009
        %v1042 = vadd.f32 %v846, %v1010
        %v1043 = vadd.f32 %v847, %v1011
        %v1044 = vld [vmem:[%s2] sm:$0x1]
        %v1046 = vlaneseq
        %v1047 = vshrl.u32 %v1046, 7
        %v1048 = vsub.s32 0, %v1047
        %v1049 = vrot.slane %v1044, %v1048
        %v1051 = vadd.f32 %v1012, %v1049
        %v1052 = vadd.f32 %v1013, %v1049
        %v1053 = vadd.f32 %v1014, %v1049
        %v1054 = vadd.f32 %v1015, %v1049
        %v1055 = vadd.f32 %v1016, %v1049
        %v1056 = vadd.f32 %v1017, %v1049
        %v1057 = vadd.f32 %v1018, %v1049
        %v1058 = vadd.f32 %v1019, %v1049
        %v1059 = vadd.f32 %v1020, %v1049
        %v1060 = vadd.f32 %v1021, %v1049
        %v1061 = vadd.f32 %v1022, %v1049
        %v1062 = vadd.f32 %v1023, %v1049
        %v1063 = vadd.f32 %v1024, %v1049
        %v1064 = vadd.f32 %v1025, %v1049
        %v1065 = vadd.f32 %v1026, %v1049
        %v1066 = vadd.f32 %v1027, %v1049
        %v1067 = vadd.f32 %v1028, %v1049
        %v1068 = vadd.f32 %v1029, %v1049
        %v1069 = vadd.f32 %v1030, %v1049
        %v1070 = vadd.f32 %v1031, %v1049
        %v1071 = vadd.f32 %v1032, %v1049
        %v1072 = vadd.f32 %v1033, %v1049
        %v1073 = vadd.f32 %v1034, %v1049
        %v1074 = vadd.f32 %v1035, %v1049
        %v1075 = vadd.f32 %v1036, %v1049
        %v1076 = vadd.f32 %v1037, %v1049
        %v1077 = vadd.f32 %v1038, %v1049
        %v1078 = vadd.f32 %v1039, %v1049
        %v1079 = vadd.f32 %v1040, %v1049
        %v1080 = vadd.f32 %v1041, %v1049
        %v1081 = vadd.f32 %v1042, %v1049
        %v1082 = vadd.f32 %v1043, %v1049
        %v1083 = vmax.f32 %v1051, 0.0
        %v1084 = vmax.f32 %v1052, 0.0
        %v1085 = vmax.f32 %v1053, 0.0
        %v1086 = vmax.f32 %v1054, 0.0
        %v1087 = vmax.f32 %v1055, 0.0
        %v1088 = vmax.f32 %v1056, 0.0
        %v1089 = vmax.f32 %v1057, 0.0
        %v1090 = vmax.f32 %v1058, 0.0
        %v1091 = vmax.f32 %v1059, 0.0
        %v1092 = vmax.f32 %v1060, 0.0
        %v1093 = vmax.f32 %v1061, 0.0
        %v1094 = vmax.f32 %v1062, 0.0
        %v1095 = vmax.f32 %v1063, 0.0
        %v1096 = vmax.f32 %v1064, 0.0
        %v1097 = vmax.f32 %v1065, 0.0
        %v1098 = vmax.f32 %v1066, 0.0
        %v1099 = vmax.f32 %v1067, 0.0
        %v1100 = vmax.f32 %v1068, 0.0
        %v1101 = vmax.f32 %v1069, 0.0
        %v1102 = vmax.f32 %v1070, 0.0
        %v1103 = vmax.f32 %v1071, 0.0
        %v1104 = vmax.f32 %v1072, 0.0
        %v1105 = vmax.f32 %v1073, 0.0
        %v1106 = vmax.f32 %v1074, 0.0
        %v1107 = vmax.f32 %v1075, 0.0
        %v1108 = vmax.f32 %v1076, 0.0
        %v1109 = vmax.f32 %v1077, 0.0
        %v1110 = vmax.f32 %v1078, 0.0
        %v1111 = vmax.f32 %v1079, 0.0
        %v1112 = vmax.f32 %v1080, 0.0
        %v1113 = vmax.f32 %v1081, 0.0
        %v1114 = vmax.f32 %v1082, 0.0
        %v1115 = vpack.c.bf16 %v1084, %v1083
        %v1116 = vpack.c.bf16 %v1086, %v1085
        %v1117 = vpack.c.bf16 %v1088, %v1087
        %v1118 = vpack.c.bf16 %v1090, %v1089
        %v1119 = vpack.c.bf16 %v1092, %v1091
        %v1120 = vpack.c.bf16 %v1094, %v1093
        %v1121 = vpack.c.bf16 %v1096, %v1095
        %v1122 = vpack.c.bf16 %v1098, %v1097
        %v1123 = vpack.c.bf16 %v1100, %v1099
        %v1124 = vpack.c.bf16 %v1102, %v1101
        %v1125 = vpack.c.bf16 %v1104, %v1103
        %v1126 = vpack.c.bf16 %v1106, %v1105
        %v1127 = vpack.c.bf16 %v1108, %v1107
        %v1128 = vpack.c.bf16 %v1110, %v1109
        %v1129 = vpack.c.bf16 %v1112, %v1111
        %v1130 = vpack.c.bf16 %v1114, %v1113
        %v1131 = vld [vmem:[%s3] sm:$0xf]
        %v1132 = vld [vmem:[%s3 + $0x4] sm:$0xf]
        %v1133 = vld [vmem:[%s3 + $0x8] sm:$0xf]
        %v1134 = vld [vmem:[%s3 + $0xc] sm:$0xf]
        %v1135 = vld [vmem:[%s3 + $0x10] sm:$0xf]
        %v1136 = vld [vmem:[%s3 + $0x14] sm:$0xf]
        %v1137 = vld [vmem:[%s3 + $0x18] sm:$0xf]
        %v1138 = vld [vmem:[%s3 + $0x1c] sm:$0xf]
        %v1139 = vld [vmem:[%s3 + $0x20] sm:$0xf]
        %v1140 = vld [vmem:[%s3 + $0x24] sm:$0xf]
        %v1141 = vld [vmem:[%s3 + $0x28] sm:$0xf]
        %v1142 = vld [vmem:[%s3 + $0x2c] sm:$0xf]
        %v1143 = vld [vmem:[%s3 + $0x30] sm:$0xf]
        %v1144 = vld [vmem:[%s3 + $0x34] sm:$0xf]
        %v1145 = vld [vmem:[%s3 + $0x38] sm:$0xf]
        %v1146 = vld [vmem:[%s3 + $0x3c] sm:$0xf]
        %v1147 = vld [vmem:[%s4] sm:$0x1]
        %v1149 = vlaneseq
        %v1150 = vshrl.u32 %v1149, 7
        %v1151 = vsub.s32 0, %v1150
        %v1152 = vrot.slane %v1147, %v1151
        %v1170 = vunpack.c.l.b16 %v1131
        %v1171 = vunpack.c.l.b16 %v1132
        %v1172 = vunpack.c.l.b16 %v1133
        %v1173 = vunpack.c.l.b16 %v1134
        %v1174 = vunpack.c.l.b16 %v1135
        %v1175 = vunpack.c.l.b16 %v1136
        %v1176 = vunpack.c.l.b16 %v1137
        %v1177 = vunpack.c.l.b16 %v1138
        %v1178 = vunpack.c.l.b16 %v1139
        %v1179 = vunpack.c.l.b16 %v1140
        %v1180 = vunpack.c.l.b16 %v1141
        %v1181 = vunpack.c.l.b16 %v1142
        %v1182 = vunpack.c.l.b16 %v1143
        %v1183 = vunpack.c.l.b16 %v1144
        %v1184 = vunpack.c.l.b16 %v1145
        %v1185 = vunpack.c.l.b16 %v1146
        %v1186 = vpack.c.b16 %v1171, %v1170
        %v1187 = vpack.c.b16 %v1173, %v1172
        %v1188 = vpack.c.b16 %v1175, %v1174
        %v1189 = vpack.c.b16 %v1177, %v1176
        %v1190 = vpack.c.b16 %v1179, %v1178
        %v1191 = vpack.c.b16 %v1181, %v1180
        %v1192 = vpack.c.b16 %v1183, %v1182
        %v1193 = vpack.c.b16 %v1185, %v1184
        %1202 = vmatprep.subr.bf16.mxu0 0
        %1203 = vmatpush1.bf16.msra.mxu0 %v1193
        %1204 = vmatprep.subr.bf16.mxu0 0
        %1205 = vmatpush1.bf16.msra.mxu0 %v1192
        %1206 = vmatprep.subr.bf16.mxu0 0
        %1207 = vmatpush1.bf16.msra.mxu0 %v1191
        %1208 = vmatprep.subr.bf16.mxu0 0
        %1209 = vmatpush1.bf16.msra.mxu0 %v1190
        %1210 = vmatprep.subr.bf16.mxu0 0
        %1211 = vmatpush1.bf16.msra.mxu0 %v1189
        %1212 = vmatprep.subr.bf16.mxu0 0
        %1213 = vmatpush1.bf16.msra.mxu0 %v1188
        %1214 = vmatprep.subr.bf16.mxu0 0
        %1215 = vmatpush1.bf16.msra.mxu0 %v1187
        %1216 = vmatprep.subr.bf16.mxu0 0
        %1217 = vmatpush1.bf16.msra.mxu0 %v1186
        %1218 = vmatprep.subr.bf16.mxu0 0
        %1219 = vmatpush2.bf16.msra.mxu0 0
        %1220 = vmatprep.subr.bf16.mxu0 0
        %1221 = vmatpush2.bf16.msra.mxu0 0
        %1222 = vmatprep.subr.bf16.mxu0 0
        %1223 = vmatpush2.bf16.msra.mxu0 0
        %1224 = vmatprep.subr.bf16.mxu0 0
        %1225 = vmatpush2.bf16.msra.mxu0 0
        %1226 = vmatprep.subr.bf16.mxu0 0
        %1227 = vmatpush2.bf16.msra.mxu0 0
        %1228 = vmatprep.subr.bf16.mxu0 0
        %1229 = vmatpush2.bf16.msra.mxu0 0
        %1230 = vmatprep.subr.bf16.mxu0 0
        %1231 = vmatpush2.bf16.msra.mxu0 0
        %1232 = vmatprep.subr.bf16.mxu0 0
        %1233 = vmatpush2.bf16.msra.mxu0 0
        %1234 = vmatprep.mubr.bf16.mxu0 0
        %1235 = vmatmul.mubr.bf16.gmra.mxu0 %v1115
        %v1236 = vpop.f32.mrf.mxu0
        %v1237 = vadd.f32 %v1152, %v1236
        %v1238 = vpop.f32.mrf.mxu0
        %v1239 = vpop.f32.mrf.mxu0
        %v1240 = vadd.f32 %v1152, %v1239
        %v1241 = vpop.f32.mrf.mxu0
        %1242 = vmatprep.mubr.bf16.mxu0 0
        %1243 = vmatmul.mubr.bf16.gmra.mxu0 %v1116
        %v1244 = vpop.f32.mrf.mxu0
        %v1245 = vadd.f32 %v1152, %v1244
        %v1246 = vpop.f32.mrf.mxu0
        %v1247 = vpop.f32.mrf.mxu0
        %v1248 = vadd.f32 %v1152, %v1247
        %v1249 = vpop.f32.mrf.mxu0
        %1250 = vmatprep.mubr.bf16.mxu0 0
        %1251 = vmatmul.mubr.bf16.gmra.mxu0 %v1117
        %v1252 = vpop.f32.mrf.mxu0
        %v1253 = vadd.f32 %v1152, %v1252
        %v1254 = vpop.f32.mrf.mxu0
        %v1255 = vpop.f32.mrf.mxu0
        %v1256 = vadd.f32 %v1152, %v1255
        %v1257 = vpop.f32.mrf.mxu0
        %1258 = vmatprep.mubr.bf16.mxu0 0
        %1259 = vmatmul.mubr.bf16.gmra.mxu0 %v1118
        %v1260 = vpop.f32.mrf.mxu0
        %v1261 = vadd.f32 %v1152, %v1260
        %v1262 = vpop.f32.mrf.mxu0
        %v1263 = vpop.f32.mrf.mxu0
        %v1264 = vadd.f32 %v1152, %v1263
        %v1265 = vpop.f32.mrf.mxu0
        %1266 = vmatprep.mubr.bf16.mxu0 0
        %1267 = vmatmul.mubr.bf16.gmra.mxu0 %v1119
        %v1268 = vpop.f32.mrf.mxu0
        %v1269 = vadd.f32 %v1152, %v1268
        %v1270 = vpop.f32.mrf.mxu0
        %v1271 = vpop.f32.mrf.mxu0
        %v1272 = vadd.f32 %v1152, %v1271
        %v1273 = vpop.f32.mrf.mxu0
        %1274 = vmatprep.mubr.bf16.mxu0 0
        %1275 = vmatmul.mubr.bf16.gmra.mxu0 %v1120
        %v1276 = vpop.f32.mrf.mxu0
        %v1277 = vadd.f32 %v1152, %v1276
        %v1278 = vpop.f32.mrf.mxu0
        %v1279 = vpop.f32.mrf.mxu0
        %v1280 = vadd.f32 %v1152, %v1279
        %v1281 = vpop.f32.mrf.mxu0
        %1282 = vmatprep.mubr.bf16.mxu0 0
        %1283 = vmatmul.mubr.bf16.gmra.mxu0 %v1121
        %v1284 = vpop.f32.mrf.mxu0
        %v1285 = vadd.f32 %v1152, %v1284
        %v1286 = vpop.f32.mrf.mxu0
        %v1287 = vpop.f32.mrf.mxu0
        %v1288 = vadd.f32 %v1152, %v1287
        %v1289 = vpop.f32.mrf.mxu0
        %1290 = vmatprep.mubr.bf16.mxu0 0
        %1291 = vmatmul.mubr.bf16.gmra.mxu0 %v1122
        %v1292 = vpop.f32.mrf.mxu0
        %v1293 = vadd.f32 %v1152, %v1292
        %v1294 = vpop.f32.mrf.mxu0
        %v1295 = vpop.f32.mrf.mxu0
        %v1296 = vadd.f32 %v1152, %v1295
        %v1297 = vpop.f32.mrf.mxu0
        %1298 = vmatprep.mubr.bf16.mxu0 0
        %1299 = vmatmul.mubr.bf16.gmra.mxu0 %v1123
        %v1300 = vpop.f32.mrf.mxu0
        %v1301 = vadd.f32 %v1152, %v1300
        %v1302 = vpop.f32.mrf.mxu0
        %v1303 = vpop.f32.mrf.mxu0
        %v1304 = vadd.f32 %v1152, %v1303
        %v1305 = vpop.f32.mrf.mxu0
        %1306 = vmatprep.mubr.bf16.mxu0 0
        %1307 = vmatmul.mubr.bf16.gmra.mxu0 %v1124
        %v1308 = vpop.f32.mrf.mxu0
        %v1309 = vadd.f32 %v1152, %v1308
        %v1310 = vpop.f32.mrf.mxu0
        %v1311 = vpop.f32.mrf.mxu0
        %v1312 = vadd.f32 %v1152, %v1311
        %v1313 = vpop.f32.mrf.mxu0
        %1314 = vmatprep.mubr.bf16.mxu0 0
        %1315 = vmatmul.mubr.bf16.gmra.mxu0 %v1125
        %v1316 = vpop.f32.mrf.mxu0
        %v1317 = vadd.f32 %v1152, %v1316
        %v1318 = vpop.f32.mrf.mxu0
        %v1319 = vpop.f32.mrf.mxu0
        %v1320 = vadd.f32 %v1152, %v1319
        %v1321 = vpop.f32.mrf.mxu0
        %1322 = vmatprep.mubr.bf16.mxu0 0
        %1323 = vmatmul.mubr.bf16.gmra.mxu0 %v1126
        %v1324 = vpop.f32.mrf.mxu0
        %v1325 = vadd.f32 %v1152, %v1324
        %v1326 = vpop.f32.mrf.mxu0
        %v1327 = vpop.f32.mrf.mxu0
        %v1328 = vadd.f32 %v1152, %v1327
        %v1329 = vpop.f32.mrf.mxu0
        %1330 = vmatprep.mubr.bf16.mxu0 0
        %1331 = vmatmul.mubr.bf16.gmra.mxu0 %v1127
        %v1332 = vpop.f32.mrf.mxu0
        %v1333 = vadd.f32 %v1152, %v1332
        %v1334 = vpop.f32.mrf.mxu0
        %v1335 = vpop.f32.mrf.mxu0
        %v1336 = vadd.f32 %v1152, %v1335
        %v1337 = vpop.f32.mrf.mxu0
        %1338 = vmatprep.mubr.bf16.mxu0 0
        %1339 = vmatmul.mubr.bf16.gmra.mxu0 %v1128
        %v1340 = vpop.f32.mrf.mxu0
        %v1341 = vadd.f32 %v1152, %v1340
        %v1342 = vpop.f32.mrf.mxu0
        %v1343 = vpop.f32.mrf.mxu0
        %v1344 = vadd.f32 %v1152, %v1343
        %v1345 = vpop.f32.mrf.mxu0
        %1346 = vmatprep.mubr.bf16.mxu0 0
        %1347 = vmatmul.mubr.bf16.gmra.mxu0 %v1129
        %v1348 = vpop.f32.mrf.mxu0
        %v1349 = vadd.f32 %v1152, %v1348
        %v1350 = vpop.f32.mrf.mxu0
        %v1351 = vpop.f32.mrf.mxu0
        %v1352 = vadd.f32 %v1152, %v1351
        %v1353 = vpop.f32.mrf.mxu0
        %1354 = vmatprep.mubr.bf16.mxu0 0
        %1355 = vmatmul.mubr.bf16.gmra.mxu0 %v1130
        %v1356 = vpop.f32.mrf.mxu0
        %v1357 = vadd.f32 %v1152, %v1356
        %v1358 = vpop.f32.mrf.mxu0
        %v1359 = vpop.f32.mrf.mxu0
        %v1360 = vadd.f32 %v1152, %v1359
        %v1361 = vpop.f32.mrf.mxu0
        %1362 = vdwg.mxu0
        %1363 = vmax.xlane.f32.xlu0 %v1237
        %v1364 = vpop.xlane.xlu0 %1363
        %1365 = vmax.xlane.f32.xlu0 %v1240
        %v1366 = vpop.xlane.xlu0 %1365
        %1367 = vmax.xlane.f32.xlu0 %v1245
        %v1368 = vpop.xlane.xlu0 %1367
        %1369 = vmax.xlane.f32.xlu0 %v1248
        %v1370 = vpop.xlane.xlu0 %1369
        %1371 = vmax.xlane.f32.xlu0 %v1253
        %v1372 = vpop.xlane.xlu0 %1371
        %1373 = vmax.xlane.f32.xlu0 %v1256
        %v1374 = vpop.xlane.xlu0 %1373
        %1375 = vmax.xlane.f32.xlu0 %v1261
        %v1376 = vpop.xlane.xlu0 %1375
        %1377 = vmax.xlane.f32.xlu0 %v1264
        %v1378 = vpop.xlane.xlu0 %1377
        %1379 = vmax.xlane.f32.xlu0 %v1269
        %v1380 = vpop.xlane.xlu0 %1379
        %1381 = vmax.xlane.f32.xlu0 %v1272
        %v1382 = vpop.xlane.xlu0 %1381
        %1383 = vmax.xlane.f32.xlu0 %v1277
        %v1384 = vpop.xlane.xlu0 %1383
        %1385 = vmax.xlane.f32.xlu0 %v1280
        %v1386 = vpop.xlane.xlu0 %1385
        %1387 = vmax.xlane.f32.xlu0 %v1285
        %v1388 = vpop.xlane.xlu0 %1387
        %1389 = vmax.xlane.f32.xlu0 %v1288
        %v1390 = vpop.xlane.xlu0 %1389
        %1391 = vmax.xlane.f32.xlu0 %v1293
        %v1392 = vpop.xlane.xlu0 %1391
        %1393 = vmax.xlane.f32.xlu0 %v1296
        %v1394 = vpop.xlane.xlu0 %1393
        %1395 = vmax.xlane.f32.xlu0 %v1301
        %v1396 = vpop.xlane.xlu0 %1395
        %1397 = vmax.xlane.f32.xlu0 %v1304
        %v1398 = vpop.xlane.xlu0 %1397
        %1399 = vmax.xlane.f32.xlu0 %v1309
        %v1400 = vpop.xlane.xlu0 %1399
        %1401 = vmax.xlane.f32.xlu0 %v1312
        %v1402 = vpop.xlane.xlu0 %1401
        %1403 = vmax.xlane.f32.xlu0 %v1317
        %v1404 = vpop.xlane.xlu0 %1403
        %1405 = vmax.xlane.f32.xlu0 %v1320
        %v1406 = vpop.xlane.xlu0 %1405
        %1407 = vmax.xlane.f32.xlu0 %v1325
        %v1408 = vpop.xlane.xlu0 %1407
        %1409 = vmax.xlane.f32.xlu0 %v1328
        %v1410 = vpop.xlane.xlu0 %1409
        %1411 = vmax.xlane.f32.xlu0 %v1333
        %v1412 = vpop.xlane.xlu0 %1411
        %1413 = vmax.xlane.f32.xlu0 %v1336
        %v1414 = vpop.xlane.xlu0 %1413
        %1415 = vmax.xlane.f32.xlu0 %v1341
        %v1416 = vpop.xlane.xlu0 %1415
        %1417 = vmax.xlane.f32.xlu0 %v1344
        %v1418 = vpop.xlane.xlu0 %1417
        %1419 = vmax.xlane.f32.xlu0 %v1349
        %v1420 = vpop.xlane.xlu0 %1419
        %1421 = vmax.xlane.f32.xlu0 %v1352
        %v1422 = vpop.xlane.xlu0 %1421
        %1423 = vmax.xlane.f32.xlu0 %v1357
        %v1424 = vpop.xlane.xlu0 %1423
        %1425 = vmax.xlane.f32.xlu0 %v1360
        %v1426 = vpop.xlane.xlu0 %1425
        %v1427 = vsub.f32 %v1237, %v1364
        %v1428 = vsub.f32 %v1240, %v1366
        %v1429 = vsub.f32 %v1245, %v1368
        %v1430 = vsub.f32 %v1248, %v1370
        %v1431 = vsub.f32 %v1253, %v1372
        %v1432 = vsub.f32 %v1256, %v1374
        %v1433 = vsub.f32 %v1261, %v1376
        %v1434 = vsub.f32 %v1264, %v1378
        %v1435 = vsub.f32 %v1269, %v1380
        %v1436 = vsub.f32 %v1272, %v1382
        %v1437 = vsub.f32 %v1277, %v1384
        %v1438 = vsub.f32 %v1280, %v1386
        %v1439 = vsub.f32 %v1285, %v1388
        %v1440 = vsub.f32 %v1288, %v1390
        %v1441 = vsub.f32 %v1293, %v1392
        %v1442 = vsub.f32 %v1296, %v1394
        %v1443 = vsub.f32 %v1301, %v1396
        %v1444 = vsub.f32 %v1304, %v1398
        %v1445 = vsub.f32 %v1309, %v1400
        %v1446 = vsub.f32 %v1312, %v1402
        %v1447 = vsub.f32 %v1317, %v1404
        %v1448 = vsub.f32 %v1320, %v1406
        %v1449 = vsub.f32 %v1325, %v1408
        %v1450 = vsub.f32 %v1328, %v1410
        %v1451 = vsub.f32 %v1333, %v1412
        %v1452 = vsub.f32 %v1336, %v1414
        %v1453 = vsub.f32 %v1341, %v1416
        %v1454 = vsub.f32 %v1344, %v1418
        %v1455 = vsub.f32 %v1349, %v1420
        %v1456 = vsub.f32 %v1352, %v1422
        %v1457 = vsub.f32 %v1357, %v1424
        %v1458 = vsub.f32 %v1360, %v1426
        %v1459 = vmul.f32 %v1427, 1.442695
        %v1460 = vpow.pop %v1459
        %v1461 = vmul.f32 %v1428, 1.442695
        %v1462 = vpow.pop %v1461
        %v1463 = vmul.f32 %v1429, 1.442695
        %v1464 = vpow.pop %v1463
        %v1465 = vmul.f32 %v1430, 1.442695
        %v1466 = vpow.pop %v1465
        %v1467 = vmul.f32 %v1431, 1.442695
        %v1468 = vpow.pop %v1467
        %v1469 = vmul.f32 %v1432, 1.442695
        %v1470 = vpow.pop %v1469
        %v1471 = vmul.f32 %v1433, 1.442695
        %v1472 = vpow.pop %v1471
        %v1473 = vmul.f32 %v1434, 1.442695
        %v1474 = vpow.pop %v1473
        %v1475 = vmul.f32 %v1435, 1.442695
        %v1476 = vpow.pop %v1475
        %v1477 = vmul.f32 %v1436, 1.442695
        %v1478 = vpow.pop %v1477
        %v1479 = vmul.f32 %v1437, 1.442695
        %v1480 = vpow.pop %v1479
        %v1481 = vmul.f32 %v1438, 1.442695
        %v1482 = vpow.pop %v1481
        %v1483 = vmul.f32 %v1439, 1.442695
        %v1484 = vpow.pop %v1483
        %v1485 = vmul.f32 %v1440, 1.442695
        %v1486 = vpow.pop %v1485
        %v1487 = vmul.f32 %v1441, 1.442695
        %v1488 = vpow.pop %v1487
        %v1489 = vmul.f32 %v1442, 1.442695
        %v1490 = vpow.pop %v1489
        %v1491 = vmul.f32 %v1443, 1.442695
        %v1492 = vpow.pop %v1491
        %v1493 = vmul.f32 %v1444, 1.442695
        %v1494 = vpow.pop %v1493
        %v1495 = vmul.f32 %v1445, 1.442695
        %v1496 = vpow.pop %v1495
        %v1497 = vmul.f32 %v1446, 1.442695
        %v1498 = vpow.pop %v1497
        %v1499 = vmul.f32 %v1447, 1.442695
        %v1500 = vpow.pop %v1499
        %v1501 = vmul.f32 %v1448, 1.442695
        %v1502 = vpow.pop %v1501
        %v1503 = vmul.f32 %v1449, 1.442695
        %v1504 = vpow.pop %v1503
        %v1505 = vmul.f32 %v1450, 1.442695
        %v1506 = vpow.pop %v1505
        %v1507 = vmul.f32 %v1451, 1.442695
        %v1508 = vpow.pop %v1507
        %v1509 = vmul.f32 %v1452, 1.442695
        %v1510 = vpow.pop %v1509
        %v1511 = vmul.f32 %v1453, 1.442695
        %v1512 = vpow.pop %v1511
        %v1513 = vmul.f32 %v1454, 1.442695
        %v1514 = vpow.pop %v1513
        %v1515 = vmul.f32 %v1455, 1.442695
        %v1516 = vpow.pop %v1515
        %v1517 = vmul.f32 %v1456, 1.442695
        %v1518 = vpow.pop %v1517
        %v1519 = vmul.f32 %v1457, 1.442695
        %v1520 = vpow.pop %v1519
        %v1521 = vmul.f32 %v1458, 1.442695
        %v1522 = vpow.pop %v1521
        %1523 = vadd.xlane.f32.xlu0 %v1460
        %v1524 = vpop.xlane.xlu0 %1523
        %1525 = vadd.xlane.f32.xlu0 %v1462
        %v1526 = vpop.xlane.xlu0 %1525
        %1527 = vadd.xlane.f32.xlu0 %v1464
        %v1528 = vpop.xlane.xlu0 %1527
        %1529 = vadd.xlane.f32.xlu0 %v1466
        %v1530 = vpop.xlane.xlu0 %1529
        %1531 = vadd.xlane.f32.xlu0 %v1468
        %v1532 = vpop.xlane.xlu0 %1531
        %1533 = vadd.xlane.f32.xlu0 %v1470
        %v1534 = vpop.xlane.xlu0 %1533
        %1535 = vadd.xlane.f32.xlu0 %v1472
        %v1536 = vpop.xlane.xlu0 %1535
        %1537 = vadd.xlane.f32.xlu0 %v1474
        %v1538 = vpop.xlane.xlu0 %1537
        %1539 = vadd.xlane.f32.xlu0 %v1476
        %v1540 = vpop.xlane.xlu0 %1539
        %1541 = vadd.xlane.f32.xlu0 %v1478
        %v1542 = vpop.xlane.xlu0 %1541
        %1543 = vadd.xlane.f32.xlu0 %v1480
        %v1544 = vpop.xlane.xlu0 %1543
        %1545 = vadd.xlane.f32.xlu0 %v1482
        %v1546 = vpop.xlane.xlu0 %1545
        %1547 = vadd.xlane.f32.xlu0 %v1484
        %v1548 = vpop.xlane.xlu0 %1547
        %1549 = vadd.xlane.f32.xlu0 %v1486
        %v1550 = vpop.xlane.xlu0 %1549
        %1551 = vadd.xlane.f32.xlu0 %v1488
        %v1552 = vpop.xlane.xlu0 %1551
        %1553 = vadd.xlane.f32.xlu0 %v1490
        %v1554 = vpop.xlane.xlu0 %1553
        %1555 = vadd.xlane.f32.xlu0 %v1492
        %v1556 = vpop.xlane.xlu0 %1555
        %1557 = vadd.xlane.f32.xlu0 %v1494
        %v1558 = vpop.xlane.xlu0 %1557
        %1559 = vadd.xlane.f32.xlu0 %v1496
        %v1560 = vpop.xlane.xlu0 %1559
        %1561 = vadd.xlane.f32.xlu0 %v1498
        %v1562 = vpop.xlane.xlu0 %1561
        %1563 = vadd.xlane.f32.xlu0 %v1500
        %v1564 = vpop.xlane.xlu0 %1563
        %1565 = vadd.xlane.f32.xlu0 %v1502
        %v1566 = vpop.xlane.xlu0 %1565
        %1567 = vadd.xlane.f32.xlu0 %v1504
        %v1568 = vpop.xlane.xlu0 %1567
        %1569 = vadd.xlane.f32.xlu0 %v1506
        %v1570 = vpop.xlane.xlu0 %1569
        %1571 = vadd.xlane.f32.xlu0 %v1508
        %v1572 = vpop.xlane.xlu0 %1571
        %1573 = vadd.xlane.f32.xlu0 %v1510
        %v1574 = vpop.xlane.xlu0 %1573
        %1575 = vadd.xlane.f32.xlu0 %v1512
        %v1576 = vpop.xlane.xlu0 %1575
        %1577 = vadd.xlane.f32.xlu0 %v1514
        %v1578 = vpop.xlane.xlu0 %1577
        %1579 = vadd.xlane.f32.xlu0 %v1516
        %v1580 = vpop.xlane.xlu0 %1579
        %1581 = vadd.xlane.f32.xlu0 %v1518
        %v1582 = vpop.xlane.xlu0 %1581
        %1583 = vadd.xlane.f32.xlu0 %v1520
        %v1584 = vpop.xlane.xlu0 %1583
        %1585 = vadd.xlane.f32.xlu0 %v1522
        %v1586 = vpop.xlane.xlu0 %1585
        %v1587 = vrcp.pop %v1524
        %v1588 = vmul.f32 %v1460, %v1587
        %v1589 = vrcp.pop %v1526
        %v1590 = vmul.f32 %v1462, %v1589
        %v1591 = vrcp.pop %v1528
        %v1592 = vmul.f32 %v1464, %v1591
        %v1593 = vrcp.pop %v1530
        %v1594 = vmul.f32 %v1466, %v1593
        %v1595 = vrcp.pop %v1532
        %v1596 = vmul.f32 %v1468, %v1595
        %v1597 = vrcp.pop %v1534
        %v1598 = vmul.f32 %v1470, %v1597
        %v1599 = vrcp.pop %v1536
        %v1600 = vmul.f32 %v1472, %v1599
        %v1601 = vrcp.pop %v1538
        %v1602 = vmul.f32 %v1474, %v1601
        %v1603 = vrcp.pop %v1540
        %v1604 = vmul.f32 %v1476, %v1603
        %v1605 = vrcp.pop %v1542
        %v1606 = vmul.f32 %v1478, %v1605
        %v1607 = vrcp.pop %v1544
        %v1608 = vmul.f32 %v1480, %v1607
        %v1609 = vrcp.pop %v1546
        %v1610 = vmul.f32 %v1482, %v1609
        %v1611 = vrcp.pop %v1548
        %v1612 = vmul.f32 %v1484, %v1611
        %v1613 = vrcp.pop %v1550
        %v1614 = vmul.f32 %v1486, %v1613
        %v1615 = vrcp.pop %v1552
        %v1616 = vmul.f32 %v1488, %v1615
        %v1617 = vrcp.pop %v1554
        %v1618 = vmul.f32 %v1490, %v1617
        %v1619 = vrcp.pop %v1556
        %v1620 = vmul.f32 %v1492, %v1619
        %v1621 = vrcp.pop %v1558
        %v1622 = vmul.f32 %v1494, %v1621
        %v1623 = vrcp.pop %v1560
        %v1624 = vmul.f32 %v1496, %v1623
        %v1625 = vrcp.pop %v1562
        %v1626 = vmul.f32 %v1498, %v1625
        %v1627 = vrcp.pop %v1564
        %v1628 = vmul.f32 %v1500, %v1627
        %v1629 = vrcp.pop %v1566
        %v1630 = vmul.f32 %v1502, %v1629
        %v1631 = vrcp.pop %v1568
        %v1632 = vmul.f32 %v1504, %v1631
        %v1633 = vrcp.pop %v1570
        %v1634 = vmul.f32 %v1506, %v1633
        %v1635 = vrcp.pop %v1572
        %v1636 = vmul.f32 %v1508, %v1635
        %v1637 = vrcp.pop %v1574
        %v1638 = vmul.f32 %v1510, %v1637
        %v1639 = vrcp.pop %v1576
        %v1640 = vmul.f32 %v1512, %v1639
        %v1641 = vrcp.pop %v1578
        %v1642 = vmul.f32 %v1514, %v1641
        %v1643 = vrcp.pop %v1580
        %v1644 = vmul.f32 %v1516, %v1643
        %v1645 = vrcp.pop %v1582
        %v1646 = vmul.f32 %v1518, %v1645
        %v1647 = vrcp.pop %v1584
        %v1648 = vmul.f32 %v1520, %v1647
        %v1649 = vrcp.pop %v1586
        %v1650 = vmul.f32 %v1522, %v1649
        %v1651 = vpack.c.bf16 %v1590, %v1588
        %v1652 = vpack.c.bf16 %v1594, %v1592
        %v1653 = vpack.c.bf16 %v1598, %v1596
        %v1654 = vpack.c.bf16 %v1602, %v1600
        %v1655 = vpack.c.bf16 %v1606, %v1604
        %v1656 = vpack.c.bf16 %v1610, %v1608
        %v1657 = vpack.c.bf16 %v1614, %v1612
        %v1658 = vpack.c.bf16 %v1618, %v1616
        %v1659 = vpack.c.bf16 %v1622, %v1620
        %v1660 = vpack.c.bf16 %v1626, %v1624
        %v1661 = vpack.c.bf16 %v1630, %v1628
        %v1662 = vpack.c.bf16 %v1634, %v1632
        %v1663 = vpack.c.bf16 %v1638, %v1636
        %v1664 = vpack.c.bf16 %v1642, %v1640
        %v1665 = vpack.c.bf16 %v1646, %v1644
        %v1666 = vpack.c.bf16 %v1650, %v1648
        %v1683 = vunpack.c.l.b16 %v1651
        %v1684 = vunpack.c.h.b16 %v1651
        %v1685 = vunpack.c.l.b16 %v1652
        %v1686 = vunpack.c.h.b16 %v1652
        %v1687 = vunpack.c.l.b16 %v1653
        %v1688 = vunpack.c.h.b16 %v1653
        %v1689 = vunpack.c.l.b16 %v1654
        %v1690 = vunpack.c.h.b16 %v1654
        %v1691 = vunpack.c.l.b16 %v1655
        %v1692 = vunpack.c.h.b16 %v1655
        %v1693 = vunpack.c.l.b16 %v1656
        %v1694 = vunpack.c.h.b16 %v1656
        %v1695 = vunpack.c.l.b16 %v1657
        %v1696 = vunpack.c.h.b16 %v1657
        %v1697 = vunpack.c.l.b16 %v1658
        %v1698 = vunpack.c.h.b16 %v1658
        %v1699 = vunpack.c.l.b16 %v1659
        %v1700 = vunpack.c.h.b16 %v1659
        %v1701 = vunpack.c.l.b16 %v1660
        %v1702 = vunpack.c.h.b16 %v1660
        %v1703 = vunpack.c.l.b16 %v1661
        %v1704 = vunpack.c.h.b16 %v1661
        %v1705 = vunpack.c.l.b16 %v1662
        %v1706 = vunpack.c.h.b16 %v1662
        %v1707 = vunpack.c.l.b16 %v1663
        %v1708 = vunpack.c.h.b16 %v1663
        %v1709 = vunpack.c.l.b16 %v1664
        %v1710 = vunpack.c.h.b16 %v1664
        %v1711 = vunpack.c.l.b16 %v1665
        %v1712 = vunpack.c.h.b16 %v1665
        %v1713 = vunpack.c.l.b16 %v1666
        %v1714 = vunpack.c.h.b16 %v1666
        %v1715 = vpack.c.b16 %v1683, %v1683
        %v1716 = vpack.c.b16 %v1684, %v1684
        %v1717 = vpack.c.b16 %v1685, %v1685
        %v1718 = vpack.c.b16 %v1686, %v1686
        %v1719 = vpack.c.b16 %v1687, %v1687
        %v1720 = vpack.c.b16 %v1688, %v1688
        %v1721 = vpack.c.b16 %v1689, %v1689
        %v1722 = vpack.c.b16 %v1690, %v1690
        %v1723 = vpack.c.b16 %v1691, %v1691
        %v1724 = vpack.c.b16 %v1692, %v1692
        %v1725 = vpack.c.b16 %v1693, %v1693
        %v1726 = vpack.c.b16 %v1694, %v1694
        %v1727 = vpack.c.b16 %v1695, %v1695
        %v1728 = vpack.c.b16 %v1696, %v1696
        %v1729 = vpack.c.b16 %v1697, %v1697
        %v1730 = vpack.c.b16 %v1698, %v1698
        %v1731 = vpack.c.b16 %v1699, %v1699
        %v1732 = vpack.c.b16 %v1700, %v1700
        %v1733 = vpack.c.b16 %v1701, %v1701
        %v1734 = vpack.c.b16 %v1702, %v1702
        %v1735 = vpack.c.b16 %v1703, %v1703
        %v1736 = vpack.c.b16 %v1704, %v1704
        %v1737 = vpack.c.b16 %v1705, %v1705
        %v1738 = vpack.c.b16 %v1706, %v1706
        %v1739 = vpack.c.b16 %v1707, %v1707
        %v1740 = vpack.c.b16 %v1708, %v1708
        %v1741 = vpack.c.b16 %v1709, %v1709
        %v1742 = vpack.c.b16 %v1710, %v1710
        %v1743 = vpack.c.b16 %v1711, %v1711
        %v1744 = vpack.c.b16 %v1712, %v1712
        %v1745 = vpack.c.b16 %v1713, %v1713
        %v1746 = vpack.c.b16 %v1714, %v1714
        %1779 = vst [vmem:[%s218] sm:$0xf] %v1715
        %1780 = vst [vmem:[%s218 + $0x4] sm:$0xf] %v1716
        %1781 = vst [vmem:[%s218 + $0x8] sm:$0xf] %v1717
        %1782 = vst [vmem:[%s218 + $0xc] sm:$0xf] %v1718
        %1783 = vst [vmem:[%s218 + $0x10] sm:$0xf] %v1719
        %1784 = vst [vmem:[%s218 + $0x14] sm:$0xf] %v1720
        %1785 = vst [vmem:[%s218 + $0x18] sm:$0xf] %v1721
        %1786 = vst [vmem:[%s218 + $0x1c] sm:$0xf] %v1722
        %1787 = vst [vmem:[%s218 + $0x20] sm:$0xf] %v1723
        %1788 = vst [vmem:[%s218 + $0x24] sm:$0xf] %v1724
        %1789 = vst [vmem:[%s218 + $0x28] sm:$0xf] %v1725
        %1790 = vst [vmem:[%s218 + $0x2c] sm:$0xf] %v1726
        %1791 = vst [vmem:[%s218 + $0x30] sm:$0xf] %v1727
        %1792 = vst [vmem:[%s218 + $0x34] sm:$0xf] %v1728
        %1793 = vst [vmem:[%s218 + $0x38] sm:$0xf] %v1729
        %1794 = vst [vmem:[%s218 + $0x3c] sm:$0xf] %v1730
        %1795 = vst [vmem:[%s218 + $0x40] sm:$0xf] %v1731
        %1796 = vst [vmem:[%s218 + $0x44] sm:$0xf] %v1732
        %1797 = vst [vmem:[%s218 + $0x48] sm:$0xf] %v1733
        %1798 = vst [vmem:[%s218 + $0x4c] sm:$0xf] %v1734
        %1799 = vst [vmem:[%s218 + $0x50] sm:$0xf] %v1735
        %1800 = vst [vmem:[%s218 + $0x54] sm:$0xf] %v1736
        %1801 = vst [vmem:[%s218 + $0x58] sm:$0xf] %v1737
        %1802 = vst [vmem:[%s218 + $0x5c] sm:$0xf] %v1738
        %1803 = vst [vmem:[%s218 + $0x60] sm:$0xf] %v1739
        %1804 = vst [vmem:[%s218 + $0x64] sm:$0xf] %v1740
        %1805 = vst [vmem:[%s218 + $0x68] sm:$0xf] %v1741
        %1806 = vst [vmem:[%s218 + $0x6c] sm:$0xf] %v1742
        %1807 = vst [vmem:[%s218 + $0x70] sm:$0xf] %v1743
        %1808 = vst [vmem:[%s218 + $0x74] sm:$0xf] %v1744
        %1809 = vst [vmem:[%s218 + $0x78] sm:$0xf] %v1745
        %1810 = vst [vmem:[%s218 + $0x7c] sm:$0xf] %v1746
        %s1811 = sand.u32 %s137, 1
        %s1812 = scalar_lea.sflag [#allocation3], %s1811
        %s1813 = sand.u32 %s137, 1
        %s1814 = smul.addr %s1813, 128
        %s1815 = scalar_lea.vmem [#allocation2], %s1814
        // Predicated region
        $region41: #{tpu_custom_call.1} parent=39 // pred_check
          %p1816 = pneg %p147
        $region42: #{tpu_custom_call.1} parent=39 // pred_check_branch
          %1818 = sbr.rel (%p1816) target = $region44
        $region43: #{tpu_custom_call.1} parent=39 // pred_region
          %s1819 = smul.u32 32, %s19
          %s1821 = ssub.s32 2048, 2048
          %1822 = vsyncadd %s1812, %s1821
          %s1823 = smul.addr %s1819, 64
          %s1824 = scalar_lea.hbm %s5, %s1823
          %s1825 = sshll.u32 %s1815, 4
          %s1826 = int_to_ptr.vmem [resolvable:$true] %s1825
          %1831 = dma.vmem_to_hbm [thread:$0]  %s1826, 2048, %s1824, %s1812, 64, 64, 4
        $region44: #{tpu_custom_call.1} parent=39 // pred_fallthru
          _
      $region40: #{tpu_custom_call.1} parent=5 // pred_fallthru
        _
      %p1832 = scmp.le.s32.totalorder 2, %s14
      // Predicated region
      $region45: #{tpu_custom_call.1} parent=5 // pred_check
        %p1833 = pneg %p1832
      $region46: #{tpu_custom_call.1} parent=5 // pred_check_branch
        %1835 = sbr.rel (%p1833) target = $region48
      $region47: #{tpu_custom_call.1} parent=5 // pred_region
        %s1836 = ssub.s32 %s14, 2
        // Predicated region
        $region49: #{tpu_custom_call.1} parent=47 // pred_check
          %p1837 = pneg %p153
        $region50: #{tpu_custom_call.1} parent=47 // pred_check_branch
          %1839 = sbr.rel (%p1837) target = $region52
        $region51: #{tpu_custom_call.1} parent=47 // pred_region
          %s1840 = sand.u32 %s138, 1
          %s1841 = scalar_lea.sflag [#allocation3], %s1840
          %s1842 = sand.u32 %s138, 1
          %s1843 = smul.addr %s1842, 128
          %s1844 = scalar_lea.vmem [#allocation2], %s1843
          %1845 = dma.done %s1841, 2048
        $region52: #{tpu_custom_call.1} parent=47 // pred_fallthru
          _
      $region48: #{tpu_custom_call.1} parent=5 // pred_fallthru
        _
    $region6: #{tpu_custom_call.1} parent=1 // loop_footer
      %s18 = sadd.s32 1, %s14
    $region7: #{tpu_custom_call.1} parent=1 // loop_footer_branch
      %13 = sbr.rel target = $region3
    $region8: #{tpu_custom_call.1} parent=1 // loop_exit
      _
    %1846 = vsyncpa [#allocation3], 1
    %s1847 = scalar_lea.sflag [#allocation3], 1
    %1848 = vsyncpa %s1847, 1

</llo_original>
